<compile_context>
chip_gen: v7x
topology: tpu7x:2x2x1
jax: 0.10.0
libtpu: 0.0.40
codegen_flags: <defaults>
</compile_context>

<pallas_src>
import functools

import jax
import jax.numpy as jnp
from jax import lax
from jax.experimental import pallas as pl
from jax.experimental.pallas import tpu as pltpu


# --------------------------------------------------------------------------- #
# VMEM budgeting helpers                                                       #
# --------------------------------------------------------------------------- #
def _round_up(x, m):
    return (x + m - 1) // m * m


def _tile_vmem_bytes(shape, dtype):
    """Approximate VMEM footprint of an array in (sublane, lane) tiled layout."""
    itemsize = jnp.dtype(dtype).itemsize
    if not shape:
        return itemsize
    lane = _round_up(shape[-1], 128)
    if len(shape) == 1:
        return lane * itemsize
    sublane_mult = 8 * max(1, 4 // itemsize)          # 8 f32 / 16 bf16 / 32 i8
    sub = _round_up(shape[-2], sublane_mult)
    lead = 1
    for d in shape[:-2]:
        lead *= d
    return lead * sub * lane * itemsize


def _vmem_plan():
    """(streaming-tile budget, vmem_limit_bytes), sized per TPU generation."""
    phys = 64 << 20                                   # conservative fallback (v7x-class)
    try:
        phys = int(getattr(pltpu.get_tpu_info(), "vmem_capacity_bytes", phys))
    except Exception:
        pass
    if phys <= (64 << 20):                            # v7x: 64 MiB physical
        return 10 << 20, 40 << 20                     # stay well under 48 MiB scoped
    return 20 << 20, 64 << 20                         # v5e / v6e: 128 MiB physical


def _pick_batch_tile(n, per_image_bytes, fixed_bytes, budget_bytes, max_bt=32):
    """Largest divisor of n that fits the budget, keeping >= 2 grid steps."""
    avail = max(budget_bytes - fixed_bytes, 2 * per_image_bytes)
    cap = max(1, avail // (2 * per_image_bytes))      # 2x: double-buffered pipeline
    cap = min(cap, max(1, (n + 1) // 2), max_bt)      # >=2 steps for megacore; bound unroll
    bt = 1
    for d in range(1, int(cap) + 1):
        if n % d == 0:                                # divisor => no ragged stats blocks
            bt = d
    return bt


# --------------------------------------------------------------------------- #
# Kernels                                                                      #
# --------------------------------------------------------------------------- #
def _zero_pad_border(xpad_ref, pad):
    """Zero only the pad border strips (interior is overwritten per image)."""
    if pad == 0:
        return
    cin, hp, wp = xpad_ref.shape
    dt = xpad_ref.dtype
    xpad_ref[:, :pad, :] = jnp.zeros((cin, pad, wp), dt)
    xpad_ref[:, hp - pad:, :] = jnp.zeros((cin, pad, wp), dt)
    xpad_ref[:, :, :pad] = jnp.zeros((cin, hp, pad), dt)
    xpad_ref[:, :, wp - pad:] = jnp.zeros((cin, hp, pad), dt)


def _relu_conv_image(x_img, w_mat, xpad_ref, patch_ref, *, kh, kw, pad):
    """ReLU + KxK conv (stride=1, dilation=1) for one image.

    x_img:     (cin, h, w)            loaded input values
    w_mat:     (cout, kh*kw*cin)      bf16 weights, row = (dy*kw+dx)*cin + ci
    xpad_ref:  (cin, h+2p, w+2p)      bf16 scratch; border already zeroed
    patch_ref: (kh*kw*cin, hout*wout) bf16 scratch (im2col patch)
    returns:   (cout, hout*wout) f32
    """
    cin, h, w = x_img.shape
    _, hp, wp = xpad_ref.shape
    hout, wout = hp - kh + 1, wp - kw + 1

    # ReLU before zero padding is exact because relu(0) == 0.
    xpad_ref[:, pad:pad + h, pad:pad + w] = jnp.maximum(
        x_img.astype(jnp.float32), 0.0).astype(xpad_ref.dtype)
    xp = xpad_ref[...]

    # im2col written directly into the patch scratch (no concatenate relayout).
    for dy in range(kh):
        for dx in range(kw):
            r = (dy * kw + dx) * cin
            patch_ref[r:r + cin, :] = xp[:, dy:dy + hout, dx:dx + wout].reshape(
                cin, hout * wout)

    # One MXU matmul per image: bf16 x bf16 -> f32 accumulation.
    return jnp.dot(w_mat, patch_ref[...], preferred_element_type=jnp.float32)


def _stats_kernel(x_ref, w_ref, stats_ref, xpad_ref, patch_ref, *, kh, kw, pad):
    """Pass 1: ReLU+conv, emit per-image BN partials [mean, M2] (lane-dense)."""
    bt = x_ref.shape[0]
    hw = patch_ref.shape[1]
    inv_hw = 1.0 / hw
    _zero_pad_border(xpad_ref, pad)
    w_mat = w_ref[...]
    for b in range(bt):                     # static unroll; nothing live across iters
        acc = _relu_conv_image(x_ref[b], w_mat, xpad_ref, patch_ref,
                               kh=kh, kw=kw, pad=pad)        # (cout, hw) f32
        mu = jnp.sum(acc, axis=1, keepdims=True) * inv_hw    # (cout, 1)
        m2 = jnp.sum((acc - mu) ** 2, axis=1, keepdims=True) # (cout, 1)
        stats_ref[b] = jnp.concatenate([mu, m2], axis=1).T   # (2, cout) lane-dense


def _apply_kernel(x_ref, w_ref, scale_ref, shift_ref, o_ref, xpad_ref, patch_ref,
                  *, kh, kw, pad):
    """Pass 2: recompute the identical conv, folded BN: y = conv*scale + shift."""
    bt = x_ref.shape[0]
    _zero_pad_border(xpad_ref, pad)
    w_mat = w_ref[...]
    scale = scale_ref[...]                  # (cout, 1)
    shift = shift_ref[...]                  # (cout, 1)
    for b in range(bt):
        acc = _relu_conv_image(x_ref[b], w_mat, xpad_ref, patch_ref,
                               kh=kh, kw=kw, pad=pad)        # (cout, hw) f32
        o_ref[b] = (acc * scale + shift).astype(o_ref.dtype) # lane-dense store


# --------------------------------------------------------------------------- #
# Wrapper                                                                      #
# --------------------------------------------------------------------------- #
def relu_conv_bn(x_nchw, weight_oihw, gamma, beta, *, padding=1, eps=1e-5):
    """ReLU -> Conv2d(k, stride=1, dilation=1, bias=False) -> BN (training mode).

    x_nchw:      (N, Cin, H, W)
    weight_oihw: (Cout, Cin, KH, KW)   PyTorch layout
    gamma/beta:  (Cout,)
    returns:     (N, Cout, Hout, Wout) NCHW
    """
    n, cin, h, w = x_nchw.shape
    cout, cin_w, kh, kw = weight_oihw.shape
    assert cin_w == cin
    hout = h + 2 * padding - (kh - 1)
    wout = w + 2 * padding - (kw - 1)
    hw = hout * wout
    hp, wp = h + 2 * padding, w + 2 * padding
    out_dtype = x_nchw.dtype

    # Tiny weight re-layout: (Cout, Cin, KH, KW) -> (Cout, KH*KW*Cin), bf16.
    w_mat = jnp.transpose(weight_oihw, (0, 2, 3, 1)).reshape(
        cout, kh * kw * cin).astype(jnp.bfloat16)

    # ---- generation-aware batch blocking -----------------------------------
    tile_budget, vmem_limit = _vmem_plan()
    per_image = (_tile_vmem_bytes((cin, h, w), x_nchw.dtype)
                 + _tile_vmem_bytes((cout, hw), out_dtype))
    fixed = (_tile_vmem_bytes((cin, hp, wp), jnp.bfloat16)
             + _tile_vmem_bytes((kh * kw * cin, hw), jnp.bfloat16)
             + _tile_vmem_bytes((cout, kh * kw * cin), jnp.bfloat16))
    bt = _pick_batch_tile(n, per_image, fixed, tile_budget)
    grid = (n // bt,)

    cparams = pltpu.CompilerParams(dimension_semantics=("parallel",),
                                   vmem_limit_bytes=vmem_limit)

    def scratches():
        return [pltpu.VMEM((cin, hp, wp), jnp.bfloat16),
                pltpu.VMEM((kh * kw * cin, hw), jnp.bfloat16)]

    matmul_flops = 2 * n * hw * cout * (kh * kw * cin)
    x_bytes = int(x_nchw.size) * jnp.dtype(x_nchw.dtype).itemsize
    w_bytes = int(w_mat.size) * 2
    out_bytes = n * cout * hw * jnp.dtype(out_dtype).itemsize

    # ---- Pass 1: ReLU + conv -> per-image BN partials only (no conv in HBM) -
    stats = pl.pallas_call(
        functools.partial(_stats_kernel, kh=kh, kw=kw, pad=padding),
        out_shape=jax.ShapeDtypeStruct((n, 2, cout), jnp.float32),
        grid=grid,
        in_specs=[
            pl.BlockSpec((bt, cin, h, w), lambda i: (i, 0, 0, 0)),
            pl.BlockSpec((cout, kh * kw * cin), lambda i: (0, 0)),
        ],
        out_specs=pl.BlockSpec((bt, 2, cout), lambda i: (i, 0, 0)),
        scratch_shapes=scratches(),
        compiler_params=cparams,
        cost_estimate=pl.CostEstimate(
            flops=matmul_flops, transcendentals=0,
            bytes_accessed=int(x_bytes + w_bytes + n * 2 * cout * 4)),
    )(x_nchw, w_mat)

    # ---- Chan-style parallel combine of per-image (mean, M2): O(N*Cout) -----
    mean_i = stats[:, 0, :]                                  # (n, cout)
    m2_i = stats[:, 1, :]                                    # (n, cout)
    mean = jnp.mean(mean_i, axis=0)                          # equal per-image counts
    m2 = jnp.sum(m2_i, axis=0) + hw * jnp.sum((mean_i - mean) ** 2, axis=0)
    var = m2 / (n * hw)                                      # biased batch variance
    g = gamma.astype(jnp.float32)
    scale = (g * lax.rsqrt(var + eps)).reshape(cout, 1)
    shift = (beta.astype(jnp.float32) - mean * scale[:, 0]).reshape(cout, 1)

    # ---- Pass 2: identical conv recompute + folded BN epilogue --------------
    out = pl.pallas_call(
        functools.partial(_apply_kernel, kh=kh, kw=kw, pad=padding),
        out_shape=jax.ShapeDtypeStruct((n, cout, hw), out_dtype),
        grid=grid,
        in_specs=[
            pl.BlockSpec((bt, cin, h, w), lambda i: (i, 0, 0, 0)),
            pl.BlockSpec((cout, kh * kw * cin), lambda i: (0, 0)),
            pl.BlockSpec((cout, 1), lambda i: (0, 0)),
            pl.BlockSpec((cout, 1), lambda i: (0, 0)),
        ],
        out_specs=pl.BlockSpec((bt, cout, hw), lambda i: (i, 0, 0)),
        scratch_shapes=scratches(),
        compiler_params=cparams,
        cost_estimate=pl.CostEstimate(
            flops=matmul_flops, transcendentals=0,
            bytes_accessed=int(x_bytes + w_bytes + out_bytes)),
    )(x_nchw, w_mat, scale, shift)

    # (N, Cout, Hout*Wout) is already contiguous NCHW => reshape is free.
    return out.reshape(n, cout, hout, wout)


# --------------------------------------------------------------------------- #
# Reference & self-test                                                        #
# --------------------------------------------------------------------------- #
def _reference(x_nchw, weight_oihw, gamma, beta, *, padding=1, eps=1e-5,
               conv_dtype=jnp.float32):
    """Plain-JAX reference: ReLU -> conv -> training-mode BN."""
    x = jnp.maximum(x_nchw.astype(jnp.float32), 0.0)
    y = lax.conv_general_dilated(
        x.astype(conv_dtype), weight_oihw.astype(conv_dtype),
        window_strides=(1, 1),
        padding=[(padding, padding), (padding, padding)],
        dimension_numbers=("NCHW", "OIHW", "NCHW"),
        preferred_element_type=jnp.float32)
    mean = jnp.mean(y, axis=(0, 2, 3), keepdims=True)
    var = jnp.mean((y - mean) ** 2, axis=(0, 2, 3), keepdims=True)
    y = (y - mean) * lax.rsqrt(var + eps)
    return y * gamma.reshape(1, -1, 1, 1) + beta.reshape(1, -1, 1, 1)


if __name__ == "__main__":
    # NAS-Bench-201-style config: c_in=4, c_out=8, kernel_size=3, stride=1,
    # padding=1, dilation=1, bias=False, affine=True (BN init: gamma=1, beta=0).
    N, C_IN, H, W = 2, 4, 16, 16
    C_OUT, K = 8, 3

    key = jax.random.PRNGKey(0)
    kx, kw_key = jax.random.split(key)
    x = jax.random.normal(kx, (N, C_IN, H, W), dtype=jnp.float32)
    weight = 0.1 * jax.random.normal(kw_key, (C_OUT, C_IN, K, K), dtype=jnp.float32)
    gamma = jnp.ones((C_OUT,), jnp.float32)
    beta = jnp.zeros((C_OUT,), jnp.float32)

    out = relu_conv_bn(x, weight, gamma, beta, padding=1, eps=1e-5)
    out = jax.block_until_ready(out)
    assert out.shape == (N, C_OUT, H, W), out.shape

    # Tight check against a reference with the same precision policy
    # (bf16 MXU operands, f32 accumulation).
    ref_bf16 = _reference(x, weight, gamma, beta, padding=1, eps=1e-5,
                          conv_dtype=jnp.bfloat16)
    err = float(jnp.max(jnp.abs(out - ref_bf16)))
    assert err < 2e-3, err

    # Looser check against the full-f32 reference; the gap documents the
    # intentional bf16-operand MXU tradeoff (BN output is ~unit scale).
    ref_f32 = _reference(x, weight, gamma, beta, padding=1, eps=1e-5,
                         conv_dtype=jnp.float32)
    err32 = float(jnp.max(jnp.abs(out - ref_f32)))
    assert err32 < 5e-2, err32

    print("KERNEL_OK")
</pallas_src>

<mosaic_0001>
module attributes {stable_mosaic.version = 11 : i64} {
  func.func @_stats_kernel(%arg0: i32, %arg1: memref<1x4x16x16xf32, #tpu.memory_space<vmem>>, %arg2: memref<8x36xbf16, #tpu.memory_space<vmem>>, %arg3: memref<1x2x8xf32, #tpu.memory_space<vmem>>, %arg4: memref<4x18x18xbf16, #tpu.memory_space<vmem>>, %arg5: memref<36x256xbf16, #tpu.memory_space<vmem>>) attributes {dimension_semantics = [#tpu.dimension_semantics<parallel>], iteration_bounds = array<i64: 2>, scalar_prefetch = 0 : i64, scratch_operands = 2 : i64, tpu.core_type = #tpu.core_type<tc>, window_params = [{transform_indices = @transform_0, window_bounds = array<i64: 1, 4, 16, 16>}, {pipeline_mode = #tpu.pipeline_mode<synchronous>, transform_indices = @transform_1, window_bounds = array<i64: 8, 36>}, {transform_indices = @transform_2, window_bounds = array<i64: 1, 2, 8>}]} {
    %cst = arith.constant 0.000000e+00 : bf16
    %0 = vector.broadcast %cst : bf16 to vector<4x1x18xbf16>
    %c0 = arith.constant 0 : index
    %c0_0 = arith.constant 0 : index
    %c0_1 = arith.constant 0 : index
    %1 = vector.load %arg4[%c0, %c0_0, %c0_1] : memref<4x18x18xbf16, #tpu.memory_space<vmem>>, vector<4x1x18xbf16>
    tpu.vector_store %arg4[%c0, %c0_0, %c0_1], %0 {strides = array<i32>} : memref<4x18x18xbf16, #tpu.memory_space<vmem>>, vector<4x1x18xbf16>,
    %cst_2 = arith.constant 0.000000e+00 : bf16
    %2 = vector.broadcast %cst_2 : bf16 to vector<4x1x18xbf16>
    %c0_3 = arith.constant 0 : index
    %c17 = arith.constant 17 : index
    %c0_4 = arith.constant 0 : index
    %3 = vector.load %arg4[%c0_3, %c17, %c0_4] : memref<4x18x18xbf16, #tpu.memory_space<vmem>>, vector<4x1x18xbf16>
    tpu.vector_store %arg4[%c0_3, %c17, %c0_4], %2 {strides = array<i32>} : memref<4x18x18xbf16, #tpu.memory_space<vmem>>, vector<4x1x18xbf16>,
    %cst_5 = arith.constant 0.000000e+00 : bf16
    %4 = vector.broadcast %cst_5 : bf16 to vector<4x18x1xbf16>
    %c0_6 = arith.constant 0 : index
    %c0_7 = arith.constant 0 : index
    %c0_8 = arith.constant 0 : index
    %5 = vector.load %arg4[%c0_6, %c0_7, %c0_8] : memref<4x18x18xbf16, #tpu.memory_space<vmem>>, vector<4x18x1xbf16>
    tpu.vector_store %arg4[%c0_6, %c0_7, %c0_8], %4 {strides = array<i32>} : memref<4x18x18xbf16, #tpu.memory_space<vmem>>, vector<4x18x1xbf16>,
    %cst_9 = arith.constant 0.000000e+00 : bf16
    %6 = vector.broadcast %cst_9 : bf16 to vector<4x18x1xbf16>
    %c0_10 = arith.constant 0 : index
    %c0_11 = arith.constant 0 : index
    %c17_12 = arith.constant 17 : index
    %7 = vector.load %arg4[%c0_10, %c0_11, %c17_12] : memref<4x18x18xbf16, #tpu.memory_space<vmem>>, vector<4x18x1xbf16>
    tpu.vector_store %arg4[%c0_10, %c0_11, %c17_12], %6 {strides = array<i32>} : memref<4x18x18xbf16, #tpu.memory_space<vmem>>, vector<4x18x1xbf16>,
    %c0_13 = arith.constant 0 : index
    %c0_14 = arith.constant 0 : index
    %8 = vector.load %arg2[%c0_13, %c0_14] : memref<8x36xbf16, #tpu.memory_space<vmem>>, vector<8x36xbf16>
    %c0_15 = arith.constant 0 : index
    %c0_16 = arith.constant 0 : index
    %c0_17 = arith.constant 0 : index
    %c0_18 = arith.constant 0 : index
    %9 = vector.load %arg1[%c0_15, %c0_16, %c0_17, %c0_18] : memref<1x4x16x16xf32, #tpu.memory_space<vmem>>, vector<1x4x16x16xf32>
    %10 = vector.shape_cast %9 : vector<1x4x16x16xf32> to vector<4x16x16xf32>
    %cst_19 = arith.constant 0.000000e+00 : f32
    %11 = vector.broadcast %cst_19 : f32 to vector<4x16x16xf32>
    %12 = arith.maximumf %10, %11 : vector<4x16x16xf32>
    %13 = arith.truncf %12 : vector<4x16x16xf32> to vector<4x16x16xbf16>
    %c0_20 = arith.constant 0 : index
    %c1 = arith.constant 1 : index
    %c1_21 = arith.constant 1 : index
    %14 = vector.load %arg4[%c0_20, %c1, %c1_21] : memref<4x18x18xbf16, #tpu.memory_space<vmem>>, vector<4x16x16xbf16>
    tpu.vector_store %arg4[%c0_20, %c1, %c1_21], %13 {strides = array<i32>} : memref<4x18x18xbf16, #tpu.memory_space<vmem>>, vector<4x16x16xbf16>,
    %c0_22 = arith.constant 0 : index
    %c0_23 = arith.constant 0 : index
    %c0_24 = arith.constant 0 : index
    %15 = vector.load %arg4[%c0_22, %c0_23, %c0_24] : memref<4x18x18xbf16, #tpu.memory_space<vmem>>, vector<4x18x18xbf16>
    %16 = vector.extract_strided_slice %15 {offsets = [0, 0, 0], sizes = [4, 16, 16], strides = [1, 1, 1]} : vector<4x18x18xbf16> to vector<4x16x16xbf16>
    %17 = vector.shape_cast %16 : vector<4x16x16xbf16> to vector<4x256xbf16>
    %c0_25 = arith.constant 0 : index
    %c0_26 = arith.constant 0 : index
    %18 = vector.load %arg5[%c0_25, %c0_26] : memref<36x256xbf16, #tpu.memory_space<vmem>>, vector<4x256xbf16>
    tpu.vector_store %arg5[%c0_25, %c0_26], %17 {strides = array<i32>} : memref<36x256xbf16, #tpu.memory_space<vmem>>, vector<4x256xbf16>,
    %19 = vector.extract_strided_slice %15 {offsets = [0, 0, 1], sizes = [4, 16, 16], strides = [1, 1, 1]} : vector<4x18x18xbf16> to vector<4x16x16xbf16>
    %20 = vector.shape_cast %19 : vector<4x16x16xbf16> to vector<4x256xbf16>
    %c4 = arith.constant 4 : index
    %c0_27 = arith.constant 0 : index
    %21 = vector.load %arg5[%c4, %c0_27] : memref<36x256xbf16, #tpu.memory_space<vmem>>, vector<4x256xbf16>
    tpu.vector_store %arg5[%c4, %c0_27], %20 {strides = array<i32>} : memref<36x256xbf16, #tpu.memory_space<vmem>>, vector<4x256xbf16>,
    %22 = vector.extract_strided_slice %15 {offsets = [0, 0, 2], sizes = [4, 16, 16], strides = [1, 1, 1]} : vector<4x18x18xbf16> to vector<4x16x16xbf16>
    %23 = vector.shape_cast %22 : vector<4x16x16xbf16> to vector<4x256xbf16>
    %c8 = arith.constant 8 : index
    %c0_28 = arith.constant 0 : index
    %24 = vector.load %arg5[%c8, %c0_28] : memref<36x256xbf16, #tpu.memory_space<vmem>>, vector<4x256xbf16>
    tpu.vector_store %arg5[%c8, %c0_28], %23 {strides = array<i32>} : memref<36x256xbf16, #tpu.memory_space<vmem>>, vector<4x256xbf16>,
    %25 = vector.extract_strided_slice %15 {offsets = [0, 1, 0], sizes = [4, 16, 16], strides = [1, 1, 1]} : vector<4x18x18xbf16> to vector<4x16x16xbf16>
    %26 = vector.shape_cast %25 : vector<4x16x16xbf16> to vector<4x256xbf16>
    %c12 = arith.constant 12 : index
    %c0_29 = arith.constant 0 : index
    %27 = vector.load %arg5[%c12, %c0_29] : memref<36x256xbf16, #tpu.memory_space<vmem>>, vector<4x256xbf16>
    tpu.vector_store %arg5[%c12, %c0_29], %26 {strides = array<i32>} : memref<36x256xbf16, #tpu.memory_space<vmem>>, vector<4x256xbf16>,
    %28 = vector.extract_strided_slice %15 {offsets = [0, 1, 1], sizes = [4, 16, 16], strides = [1, 1, 1]} : vector<4x18x18xbf16> to vector<4x16x16xbf16>
    %29 = vector.shape_cast %28 : vector<4x16x16xbf16> to vector<4x256xbf16>
    %c16 = arith.constant 16 : index
    %c0_30 = arith.constant 0 : index
    %30 = vector.load %arg5[%c16, %c0_30] : memref<36x256xbf16, #tpu.memory_space<vmem>>, vector<4x256xbf16>
    tpu.vector_store %arg5[%c16, %c0_30], %29 {strides = array<i32>} : memref<36x256xbf16, #tpu.memory_space<vmem>>, vector<4x256xbf16>,
    %31 = vector.extract_strided_slice %15 {offsets = [0, 1, 2], sizes = [4, 16, 16], strides = [1, 1, 1]} : vector<4x18x18xbf16> to vector<4x16x16xbf16>
    %32 = vector.shape_cast %31 : vector<4x16x16xbf16> to vector<4x256xbf16>
    %c20 = arith.constant 20 : index
    %c0_31 = arith.constant 0 : index
    %33 = vector.load %arg5[%c20, %c0_31] : memref<36x256xbf16, #tpu.memory_space<vmem>>, vector<4x256xbf16>
    tpu.vector_store %arg5[%c20, %c0_31], %32 {strides = array<i32>} : memref<36x256xbf16, #tpu.memory_space<vmem>>, vector<4x256xbf16>,
    %34 = vector.extract_strided_slice %15 {offsets = [0, 2, 0], sizes = [4, 16, 16], strides = [1, 1, 1]} : vector<4x18x18xbf16> to vector<4x16x16xbf16>
    %35 = vector.shape_cast %34 : vector<4x16x16xbf16> to vector<4x256xbf16>
    %c24 = arith.constant 24 : index
    %c0_32 = arith.constant 0 : index
    %36 = vector.load %arg5[%c24, %c0_32] : memref<36x256xbf16, #tpu.memory_space<vmem>>, vector<4x256xbf16>
    tpu.vector_store %arg5[%c24, %c0_32], %35 {strides = array<i32>} : memref<36x256xbf16, #tpu.memory_space<vmem>>, vector<4x256xbf16>,
    %37 = vector.extract_strided_slice %15 {offsets = [0, 2, 1], sizes = [4, 16, 16], strides = [1, 1, 1]} : vector<4x18x18xbf16> to vector<4x16x16xbf16>
    %38 = vector.shape_cast %37 : vector<4x16x16xbf16> to vector<4x256xbf16>
    %c28 = arith.constant 28 : index
    %c0_33 = arith.constant 0 : index
    %39 = vector.load %arg5[%c28, %c0_33] : memref<36x256xbf16, #tpu.memory_space<vmem>>, vector<4x256xbf16>
    tpu.vector_store %arg5[%c28, %c0_33], %38 {strides = array<i32>} : memref<36x256xbf16, #tpu.memory_space<vmem>>, vector<4x256xbf16>,
    %40 = vector.extract_strided_slice %15 {offsets = [0, 2, 2], sizes = [4, 16, 16], strides = [1, 1, 1]} : vector<4x18x18xbf16> to vector<4x16x16xbf16>
    %41 = vector.shape_cast %40 : vector<4x16x16xbf16> to vector<4x256xbf16>
    %c32 = arith.constant 32 : index
    %c0_34 = arith.constant 0 : index
    %42 = vector.load %arg5[%c32, %c0_34] : memref<36x256xbf16, #tpu.memory_space<vmem>>, vector<4x256xbf16>
    tpu.vector_store %arg5[%c32, %c0_34], %41 {strides = array<i32>} : memref<36x256xbf16, #tpu.memory_space<vmem>>, vector<4x256xbf16>,
    %c0_35 = arith.constant 0 : index
    %c0_36 = arith.constant 0 : index
    %43 = vector.load %arg5[%c0_35, %c0_36] : memref<36x256xbf16, #tpu.memory_space<vmem>>, vector<36x256xbf16>
    %cst_37 = arith.constant dense<0.000000e+00> : vector<8x256xf32>
    %44 = tpu.matmul %8, %43, %cst_37 {dimension_numbers = #tpu.dot_dimension_numbers<[1], [0], [0], [1], [0, 0, 1, 1], [], []>} : vector<8x36xbf16>, vector<36x256xbf16>, vector<8x256xf32> -> vector<8x256xf32>
    %cst_38 = arith.constant dense<0.000000e+00> : vector<8xf32>
    %45 = vector.multi_reduction <add>, %44, %cst_38 [1] : vector<8x256xf32> to vector<8xf32>
    %46 = vector.shape_cast %45 : vector<8xf32> to vector<8x1xf32>
    %cst_39 = arith.constant 3.906250e-03 : f32
    %47 = vector.broadcast %cst_39 : f32 to vector<8x1xf32>
    %48 = arith.mulf %46, %47 : vector<8x1xf32>
    %49 = vector.broadcast %48 : vector<8x1xf32> to vector<8x256xf32>
    %50 = arith.subf %44, %49 : vector<8x256xf32>
    %51 = arith.mulf %50, %50 : vector<8x256xf32>
    %cst_40 = arith.constant dense<0.000000e+00> : vector<8xf32>
    %52 = vector.multi_reduction <add>, %51, %cst_40 [1] : vector<8x256xf32> to vector<8xf32>
    %53 = vector.shape_cast %52 : vector<8xf32> to vector<8x1xf32>
    %54 = tpu.concatenate %48, %53 in 1 : vector<8x1xf32>, vector<8x1xf32> -> vector<8x2xf32>
    %55 = tpu.transpose %54, [1, 0] : vector<8x2xf32> -> vector<2x8xf32>
    %c0_41 = arith.constant 0 : index
    %c0_42 = arith.constant 0 : index
    %c0_43 = arith.constant 0 : index
    %56 = vector.load %arg3[%c0_41, %c0_42, %c0_43] : memref<1x2x8xf32, #tpu.memory_space<vmem>>, vector<1x2x8xf32>
    %57 = vector.shape_cast %56 : vector<1x2x8xf32> to vector<2x8xf32>
    %58 = vector.shape_cast %55 : vector<2x8xf32> to vector<1x2x8xf32>
    tpu.vector_store %arg3[%c0_41, %c0_42, %c0_43], %58 {strides = array<i32>} : memref<1x2x8xf32, #tpu.memory_space<vmem>>, vector<1x2x8xf32>,
    return
  }
  func.func @transform_0(%arg0: i32) -> (i32, i32, i32, i32) {
    %c0_i32 = arith.constant 0 : i32
    %c0_i32_0 = arith.constant 0 : i32
    %c0_i32_1 = arith.constant 0 : i32
    %c0_i32_2 = arith.constant 0 : i32
    return %arg0, %c0_i32, %c0_i32_0, %c0_i32_1 : i32, i32, i32, i32
  }
  func.func @transform_1(%arg0: i32) -> (i32, i32) {
    %c0_i32 = arith.constant 0 : i32
    %c0_i32_0 = arith.constant 0 : i32
    %c0_i32_1 = arith.constant 0 : i32
    return %c0_i32, %c0_i32_0 : i32, i32
  }
  func.func @transform_2(%arg0: i32) -> (i32, i32, i32) {
    %c0_i32 = arith.constant 0 : i32
    %c0_i32_0 = arith.constant 0 : i32
    %c0_i32_1 = arith.constant 0 : i32
    return %arg0, %c0_i32, %c0_i32_0 : i32, i32, i32
  }
}

</mosaic_0001>

<llo_original>
// kernel: tpu_custom_call.1
$region0: #{tpu_custom_call.1}
  #allocation0 [shape = 'u32[]', space=smem, size = 0x4, offset = 0x4, fixed_abs, tag = 'smem constant byte address 0x4 - core index']
  #allocation1 [shape = 'u32[144,128]{1,0:T(1,128)}', space=vmem, size = 0x12000, scoped, tag = 'internal scratch']
  #allocation2 [shape = 'bf16[4,18,18]{2,1,0:T(8,128)(2,1)}', space=vmem, size = 0x6000, scoped, tag = 'scratch operand']
  #allocation3 [shape = 'bf16[36,256]{1,0:T(8,128)(2,1)}', space=vmem, size = 0x5000, scoped, tag = 'scratch operand']
  %s0 = inlined_call_operand.hbm [shape: f32[2,4,16,16], index: 0, kind: input, shape index: {}]
  %s1 = inlined_call_operand.hbm [shape: bf16[8,36], index: 1, kind: input, shape index: {}]
  %s2 = inlined_call_operand.hbm [shape: f32[2,2,8], index: 2, kind: output, shape index: {}]
  %s3 = sld [smem:[#allocation0]]
  $region49: #{tpu_custom_call.1} parent=0
    _
  %s5 = ssub.s32 1, %s3
  %s6 = scalar_select 0, %s5, %s3
  $region1: #{tpu_custom_call.1} parent=0
    #allocation4 [shape = 'u8[65536]{0}', space=vmem, size = 0x10000, scoped, tag = 'input window, operand 0']
    #allocation5 [shape = 's32[2]{0}', space=sflag, size = 0x8, scoped, tag = 'scoped memory for tpu_custom_call.1']
    #allocation6 [shape = 's32[2]{0}', space=sflag, size = 0x8, scoped, tag = 'scoped memory for tpu_custom_call.1']
    #allocation7 [shape = 'u8[2048]{0}', space=vmem, size = 0x800, scoped, tag = 'input window, operand 1, single buffered']
    #allocation8 [shape = 's32[1]{0}', space=sflag, size = 0x4, scoped, tag = 'scoped memory for tpu_custom_call.1']
    #allocation9 [shape = 'u8[2048]{0}', space=vmem, size = 0x800, scoped, tag = 'output window, operand 0']
    %7 = vsyncpa [#allocation5], 0
    %s8 = scalar_lea.sflag [#allocation5], 1
    %9 = vsyncpa %s8, 0
    %10 = vsyncpa [#allocation8], 0
    %11 = vsyncpa [#allocation6], 0
    %s12 = scalar_lea.sflag [#allocation6], 1
    %13 = vsyncpa %s12, 0
    loop: start=0, step=1, limit=4
    $region2: #{tpu_custom_call.1} parent=1 // loop_pre_header
      _
    $region3: #{tpu_custom_call.1} parent=1 // loop_header
      %s15 = sphi 0, %s19
      %p16 = scmp.ge.s32.totalorder %s15, 4
      %s25 = sphi 0, %s27
      %s28 = sphi 0, %s25
      %s29 = sphi 0, %s28
      %s45 = sphi 0, %s29
      %s49 = sphi 0, %s49
      %s51 = sphi 0, %s49
      %s52 = sphi 0, %s51
      %s66 = sphi 0, %s52
      %s72 = sphi 0, %s74
      %s75 = sphi 0, %s72
      %s76 = sphi 0, %s75
      %s92 = sphi 0, %s76
    $region4: #{tpu_custom_call.1} parent=1 // loop_header_branch
      %18 = sbr.rel (%p16) target = $region8
    $region5: #{tpu_custom_call.1} parent=1 // loop_body
      %s20 = ssub.s32 %s15, 1
      %s21 = ssub.s32 %s15, 2
      %s22 = sadd.s32 %s15, 1
      %s23 = ssub.s32 %s15, %s22
      %p24 = scmp.eq.s32.totalorder %s23, 0
      %s26 = sadd.s32 %s25, 1
      %s27 = scalar_select %p24, %s25, %s26
      %p30 = pneg %p24
      %p31 = scmp.eq.s32.totalorder %s15, 1
      %p32 = por %p30, %p31
      %p33 = scmp.ne.s32.totalorder %s25, %s28
      %p34 = scmp.eq.s32.totalorder %s15, 0
      %p35 = por %p33, %p34
      %p36 = scmp.ne.s32.totalorder %s25, %s28
      %p37 = scmp.eq.s32.totalorder %s20, 1
      %p38 = por %p36, %p37
      %p39 = scmp.ne.s32.totalorder %s28, %s29
      %p40 = scmp.eq.s32.totalorder %s20, 0
      %p41 = por %p39, %p40
      %p42 = scmp.ne.s32.totalorder %s28, %s29
      %p43 = scmp.eq.s32.totalorder %s21, 1
      %p44 = por %p42, %p43
      %p46 = scmp.ne.s32.totalorder %s29, %s45
      %p47 = scmp.eq.s32.totalorder %s21, 0
      %p48 = por %p46, %p47
      %s50 = sadd.s32 %s49, 1
      %p53 = scmp.eq.s32.totalorder %s15, 1
      %p54 = scmp.ne.s32.totalorder %s49, %s51
      %p55 = scmp.eq.s32.totalorder %s15, 0
      %p56 = por %p54, %p55
      %p57 = scmp.ne.s32.totalorder %s49, %s51
      %p58 = scmp.eq.s32.totalorder %s20, 1
      %p59 = por %p57, %p58
      %p60 = scmp.ne.s32.totalorder %s51, %s52
      %p61 = scmp.eq.s32.totalorder %s20, 0
      %p62 = por %p60, %p61
      %p63 = scmp.ne.s32.totalorder %s51, %s52
      %p64 = scmp.eq.s32.totalorder %s21, 1
      %p65 = por %p63, %p64
      %p67 = scmp.ne.s32.totalorder %s52, %s66
      %p68 = scmp.eq.s32.totalorder %s21, 0
      %p69 = por %p67, %p68
      %s70 = ssub.s32 %s15, %s22
      %p71 = scmp.eq.s32.totalorder %s70, 0
      %s73 = sadd.s32 %s72, 1
      %s74 = scalar_select %p71, %s72, %s73
      %p77 = pneg %p71
      %p78 = scmp.eq.s32.totalorder %s15, 1
      %p79 = por %p77, %p78
      %p80 = scmp.ne.s32.totalorder %s72, %s75
      %p81 = scmp.eq.s32.totalorder %s15, 0
      %p82 = por %p80, %p81
      %p83 = scmp.ne.s32.totalorder %s72, %s75
      %p84 = scmp.eq.s32.totalorder %s20, 1
      %p85 = por %p83, %p84
      %p86 = scmp.ne.s32.totalorder %s75, %s76
      %p87 = scmp.eq.s32.totalorder %s20, 0
      %p88 = por %p86, %p87
      %p89 = scmp.ne.s32.totalorder %s75, %s76
      %p90 = scmp.eq.s32.totalorder %s21, 1
      %p91 = por %p89, %p90
      %p93 = scmp.ne.s32.totalorder %s76, %s92
      %p94 = scmp.eq.s32.totalorder %s21, 0
      %p95 = por %p93, %p94
      %p96 = scmp.le.s32.totalorder 1, %s15
      %p97 = scmp.lt.s32.totalorder %s15, 3
      %p98 = pnand %p96, %p97
      %p99 = pneg %p98
      // Predicated region
      $region9: #{tpu_custom_call.1} parent=5 // pred_check
        _
      $region10: #{tpu_custom_call.1} parent=5 // pred_check_branch
        %101 = sbr.rel (%p98) target = $region12
      $region11: #{tpu_custom_call.1} parent=5 // pred_region
        %s102 = ssub.s32 %s15, 1
        // Predicated region
        $region13: #{tpu_custom_call.1} parent=11 // pred_check
          %p103 = pneg %p62
        $region14: #{tpu_custom_call.1} parent=11 // pred_check_branch
          %105 = sbr.rel (%p103) target = $region16
        $region15: #{tpu_custom_call.1} parent=11 // pred_region
          %s107 = ssub.s32 64, 64
          %108 = vsyncadd [#allocation8], %s107
          %s110 = sshll.u32 [#allocation7], 4
          %s111 = int_to_ptr.vmem [resolvable:$true] %s110
          %113 = dma.hbm_to_vmem [thread:$0]  %s1, 64, %s111, [#allocation8]
        $region16: #{tpu_custom_call.1} parent=11 // pred_fallthru
          _
      $region12: #{tpu_custom_call.1} parent=5 // pred_fallthru
        _
      %p114 = scmp.lt.s32.totalorder %s15, 2
      // Predicated region
      $region17: #{tpu_custom_call.1} parent=5 // pred_check
        %p115 = pneg %p114
      $region18: #{tpu_custom_call.1} parent=5 // pred_check_branch
        %117 = sbr.rel (%p115) target = $region20
      $region19: #{tpu_custom_call.1} parent=5 // pred_region
        // Predicated region
        $region21: #{tpu_custom_call.1} parent=19 // pred_check
          %p118 = pneg %p35
        $region22: #{tpu_custom_call.1} parent=19 // pred_check_branch
          %120 = sbr.rel (%p118) target = $region24
        $region23: #{tpu_custom_call.1} parent=19 // pred_region
          %s121 = sand.u32 %s25, 1
          %s122 = scalar_lea.sflag [#allocation5], %s121
          %s123 = sand.u32 %s25, 1
          %s124 = smul.addr %s123, 64
          %s125 = scalar_lea.vmem [#allocation4], %s124
          %s127 = ssub.s32 1024, 1024
          %128 = vsyncadd %s122, %s127
          %s129 = smul.addr %s15, 8
          %s130 = smul.addr %s129, 128
          %s131 = scalar_lea.hbm %s0, %s130
          %s132 = sshll.u32 %s125, 4
          %s133 = int_to_ptr.vmem [resolvable:$true] %s132
          %138 = dma.hbm_to_vmem [thread:$0]  %s131, 1024, %s133, %s122, 128, 128, 8
        $region24: #{tpu_custom_call.1} parent=19 // pred_fallthru
          _
      $region20: #{tpu_custom_call.1} parent=5 // pred_fallthru
        _
      %p139 = scmp.le.s32.totalorder 1, %s15
      %p140 = scmp.lt.s32.totalorder %s15, 3
      %p141 = pnand %p139, %p140
      %p142 = pneg %p141
      // Predicated region
      $region25: #{tpu_custom_call.1} parent=5 // pred_check
        _
      $region26: #{tpu_custom_call.1} parent=5 // pred_check_branch
        %144 = sbr.rel (%p141) target = $region28
      $region27: #{tpu_custom_call.1} parent=5 // pred_region
        %s145 = ssub.s32 %s15, 1
        %s146 = sand.u32 %s28, 1
        %s147 = scalar_lea.sflag [#allocation5], %s146
        %s148 = sand.u32 %s28, 1
        %s149 = smul.addr %s148, 64
        %s150 = scalar_lea.vmem [#allocation4], %s149
        // Predicated region
        $region29: #{tpu_custom_call.1} parent=27 // pred_check
          %p151 = pneg %p41
        $region30: #{tpu_custom_call.1} parent=27 // pred_check_branch
          %153 = sbr.rel (%p151) target = $region32
        $region31: #{tpu_custom_call.1} parent=27 // pred_region
          %154 = dma.done %s147, 1024
        $region32: #{tpu_custom_call.1} parent=27 // pred_fallthru
          _
        // Predicated region
        $region33: #{tpu_custom_call.1} parent=27 // pred_check
          %p155 = pneg %p62
        $region34: #{tpu_custom_call.1} parent=27 // pred_check_branch
          %157 = sbr.rel (%p155) target = $region36
        $region35: #{tpu_custom_call.1} parent=27 // pred_region
          %158 = dma.done [#allocation8], 64
        $region36: #{tpu_custom_call.1} parent=27 // pred_fallthru
          _
        %s159 = sand.u32 %s28, 1
        %s160 = scalar_lea.sflag [#allocation5], %s159
        %s161 = sand.u32 %s28, 1
        %s162 = smul.addr %s161, 64
        %s163 = scalar_lea.vmem [#allocation4], %s162
        %p164 = pneg %p41
        %p165 = pneg %p38
        %p166 = pneg %p62
        %p167 = pneg %p59
        %p168 = pneg %p88
        %p169 = pneg %p85
        %s170 = sand.u32 %s75, 1
        %s171 = scalar_lea.sflag [#allocation6], %s170
        %s172 = sand.u32 %s75, 1
        %s173 = smul.addr %s172, 2
        %s174 = scalar_lea.vmem [#allocation9], %s173
        %vm176 = vcmask 139264
        %vm177 = vsmask.f32 256
        %vm178 = vmand %vm176, %vm177
        %v179 = vld [vmem:[#allocation2] sm:$0x1]
        %v180 = vsel %vm178, 0, %v179
        %181 = vst [vmem:[#allocation2] sm:$0x1] %v180
        %v182 = vld [vmem:[#allocation2 + $0xc] sm:$0x1]
        %v183 = vsel %vm178, 0, %v182
        %184 = vst [vmem:[#allocation2 + $0xc] sm:$0x1] %v183
        %v185 = vld [vmem:[#allocation2 + $0x18] sm:$0x1]
        %v186 = vsel %vm178, 0, %v185
        %187 = vst [vmem:[#allocation2 + $0x18] sm:$0x1] %v186
        %v188 = vld [vmem:[#allocation2 + $0x24] sm:$0x1]
        %v189 = vsel %vm178, 0, %v188
        %190 = vst [vmem:[#allocation2 + $0x24] sm:$0x1] %v189
        %vm191 = vsmask.f32 7938
        %vm192 = vmand %vm176, %vm191
        %v193 = vld [vmem:[#allocation2 + $0x8] sm:$0x1]
        %v194 = vsel %vm192, 0, %v193
        %195 = vst [vmem:[#allocation2 + $0x8] sm:$0x1] %v194
        %v196 = vld [vmem:[#allocation2 + $0x14] sm:$0x1]
        %v197 = vsel %vm192, 0, %v196
        %198 = vst [vmem:[#allocation2 + $0x14] sm:$0x1] %v197
        %v199 = vld [vmem:[#allocation2 + $0x20] sm:$0x1]
        %v200 = vsel %vm192, 0, %v199
        %201 = vst [vmem:[#allocation2 + $0x20] sm:$0x1] %v200
        %v202 = vld [vmem:[#allocation2 + $0x2c] sm:$0x1]
        %v203 = vsel %vm192, 0, %v202
        %204 = vst [vmem:[#allocation2 + $0x2c] sm:$0x1] %v203
        %vm205 = vcmask 3072
        %206 = vst.msk [vmem:[#allocation2] sm:$0xf] %vm205, 0
        %207 = vst.msk [vmem:[#allocation2 + $0x4] sm:$0xf] %vm205, 0
        %vm208 = vcmask 0
        %209 = vst.msk [vmem:[#allocation2 + $0x8] sm:$0x1] %vm208, 0
        %210 = vst.msk [vmem:[#allocation2 + $0xc] sm:$0xf] %vm205, 0
        %211 = vst.msk [vmem:[#allocation2 + $0x10] sm:$0xf] %vm205, 0
        %212 = vst.msk [vmem:[#allocation2 + $0x14] sm:$0x1] %vm208, 0
        %213 = vst.msk [vmem:[#allocation2 + $0x18] sm:$0xf] %vm205, 0
        %214 = vst.msk [vmem:[#allocation2 + $0x1c] sm:$0xf] %vm205, 0
        %215 = vst.msk [vmem:[#allocation2 + $0x20] sm:$0x1] %vm208, 0
        %216 = vst.msk [vmem:[#allocation2 + $0x24] sm:$0xf] %vm205, 0
        %217 = vst.msk [vmem:[#allocation2 + $0x28] sm:$0xf] %vm205, 0
        %218 = vst.msk [vmem:[#allocation2 + $0x2c] sm:$0x1] %vm208, 0
        %vm219 = vcmask 142472
        %220 = vst.msk [vmem:[#allocation2] sm:$0xf] %vm219, 0
        %221 = vst.msk [vmem:[#allocation2 + $0x4] sm:$0xf] %vm219, 0
        %vm222 = vcmask 139400
        %223 = vst.msk [vmem:[#allocation2 + $0x8] sm:$0x1] %vm222, 0
        %224 = vst.msk [vmem:[#allocation2 + $0xc] sm:$0xf] %vm219, 0
        %225 = vst.msk [vmem:[#allocation2 + $0x10] sm:$0xf] %vm219, 0
        %226 = vst.msk [vmem:[#allocation2 + $0x14] sm:$0x1] %vm222, 0
        %227 = vst.msk [vmem:[#allocation2 + $0x18] sm:$0xf] %vm219, 0
        %228 = vst.msk [vmem:[#allocation2 + $0x1c] sm:$0xf] %vm219, 0
        %229 = vst.msk [vmem:[#allocation2 + $0x20] sm:$0x1] %vm222, 0
        %230 = vst.msk [vmem:[#allocation2 + $0x24] sm:$0xf] %vm219, 0
        %231 = vst.msk [vmem:[#allocation2 + $0x28] sm:$0xf] %vm219, 0
        %232 = vst.msk [vmem:[#allocation2 + $0x2c] sm:$0x1] %vm222, 0
        %v233 = vld [vmem:[#allocation7] sm:$0xf]
        %v234 = vld [vmem:[%s150] sm:$0xff]
        %v235 = vld [vmem:[%s150 + $0x8] sm:$0xff]
        %v236 = vld [vmem:[%s150 + $0x10] sm:$0xff]
        %v237 = vld [vmem:[%s150 + $0x18] sm:$0xff]
        %v238 = vld [vmem:[%s150 + $0x20] sm:$0xff]
        %v239 = vld [vmem:[%s150 + $0x28] sm:$0xff]
        %v240 = vld [vmem:[%s150 + $0x30] sm:$0xff]
        %v241 = vld [vmem:[%s150 + $0x38] sm:$0xff]
        %v242 = vmax.f32 %v234, 0.0
        %v243 = vmax.f32 %v235, 0.0
        %v244 = vmax.f32 %v236, 0.0
        %v245 = vmax.f32 %v237, 0.0
        %v246 = vmax.f32 %v238, 0.0
        %v247 = vmax.f32 %v239, 0.0
        %v248 = vmax.f32 %v240, 0.0
        %v249 = vmax.f32 %v241, 0.0
        %v250 = vpack.c.bf16 %v243, %v242
        %v251 = vpack.c.bf16 %v245, %v244
        %v252 = vpack.c.bf16 %v247, %v246
        %v253 = vpack.c.bf16 %v249, %v248
        %v258 = vunpack.c.l.b16 %v250
        %v259 = vunpack.c.h.b16 %v250
        %v260 = vunpack.c.l.b16 %v251
        %v261 = vunpack.c.h.b16 %v251
        %v262 = vunpack.c.l.b16 %v252
        %v263 = vunpack.c.h.b16 %v252
        %v264 = vunpack.c.l.b16 %v253
        %v265 = vunpack.c.h.b16 %v253
        %v266 = vpack.c.b16 %v258, %v258
        %v267 = vpack.c.b16 %v259, %v259
        %v268 = vpack.c.b16 %v260, %v260
        %v269 = vpack.c.b16 %v261, %v261
        %v270 = vpack.c.b16 %v262, %v262
        %v271 = vpack.c.b16 %v263, %v263
        %v272 = vpack.c.b16 %v264, %v264
        %v273 = vpack.c.b16 %v265, %v265
        %vm274 = vsmask.f32 4368
        %vm275 = vmor %vm177, %vm274
        %v277 = vshrl.u32 %v266, 16
        %v279 = vrot.slane %v277, 7
        %v280 = vshll.u32 %v266, 16
        %v282 = vor.u32 %v279, %v280
        %v283 = vrot.slane %v279, 4
        %v285 = vshrl.u32 %v267, 16
        %v287 = vrot.slane %v285, 7
        %v288 = vshll.u32 %v267, 16
        %v290 = vor.u32 %v287, %v288
        %v291 = vsel %vm275, %v283, %v290
        %v292 = vrot.slane %v287, 4
        %v294 = vshrl.u32 %v268, 16
        %v296 = vrot.slane %v294, 7
        %v297 = vshll.u32 %v268, 16
        %v299 = vor.u32 %v296, %v297
        %v300 = vrot.slane %v296, 4
        %v302 = vshrl.u32 %v269, 16
        %v304 = vrot.slane %v302, 7
        %v305 = vshll.u32 %v269, 16
        %v307 = vor.u32 %v304, %v305
        %v308 = vsel %vm275, %v300, %v307
        %v309 = vrot.slane %v304, 4
        %v311 = vshrl.u32 %v270, 16
        %v313 = vrot.slane %v311, 7
        %v314 = vshll.u32 %v270, 16
        %v316 = vor.u32 %v313, %v314
        %v317 = vrot.slane %v313, 4
        %v319 = vshrl.u32 %v271, 16
        %v321 = vrot.slane %v319, 7
        %v322 = vshll.u32 %v271, 16
        %v324 = vor.u32 %v321, %v322
        %v325 = vsel %vm275, %v317, %v324
        %v326 = vrot.slane %v321, 4
        %v328 = vshrl.u32 %v272, 16
        %v330 = vrot.slane %v328, 7
        %v331 = vshll.u32 %v272, 16
        %v333 = vor.u32 %v330, %v331
        %v334 = vrot.slane %v330, 4
        %v336 = vshrl.u32 %v273, 16
        %v338 = vrot.slane %v336, 7
        %v339 = vshll.u32 %v273, 16
        %v341 = vor.u32 %v338, %v339
        %v342 = vsel %vm275, %v334, %v341
        %v343 = vrot.slane %v338, 4
        %344 = vrot.lane.b32.xlu0 %v282, 1
        %v345 = vpop.permute.xlu0 %344
        %346 = vrot.lane.b32.xlu0 %v291, 1
        %v347 = vpop.permute.xlu0 %346
        %348 = vrot.lane.b32.xlu0 %v292, 1
        %v349 = vpop.permute.xlu0 %348
        %350 = vrot.lane.b32.xlu0 %v299, 1
        %v351 = vpop.permute.xlu0 %350
        %352 = vrot.lane.b32.xlu0 %v308, 1
        %v353 = vpop.permute.xlu0 %352
        %354 = vrot.lane.b32.xlu0 %v309, 1
        %v355 = vpop.permute.xlu0 %354
        %356 = vrot.lane.b32.xlu0 %v316, 1
        %v357 = vpop.permute.xlu0 %356
        %358 = vrot.lane.b32.xlu0 %v325, 1
        %v359 = vpop.permute.xlu0 %358
        %360 = vrot.lane.b32.xlu0 %v326, 1
        %v361 = vpop.permute.xlu0 %360
        %362 = vrot.lane.b32.xlu0 %v333, 1
        %v363 = vpop.permute.xlu0 %362
        %364 = vrot.lane.b32.xlu0 %v342, 1
        %v365 = vpop.permute.xlu0 %364
        %366 = vrot.lane.b32.xlu0 %v343, 1
        %v367 = vpop.permute.xlu0 %366
        %vm380 = vcmask 134152
        %vm381 = vmand %vm380, %vm191
        %v382 = vld [vmem:[#allocation2] sm:$0xf]
        %v383 = vsel %vm381, %v345, %v382
        %384 = vst [vmem:[#allocation2] sm:$0xf] %v383
        %vm385 = vcmask 134152
        %386 = vst.msk [vmem:[#allocation2 + $0x4] sm:$0xf] %vm385, %v347
        %vm387 = vcmask 131080
        %vm388 = vmand %vm387, %vm177
        %v389 = vld [vmem:[#allocation2 + $0x8] sm:$0x1]
        %v390 = vsel %vm388, %v349, %v389
        %391 = vst [vmem:[#allocation2 + $0x8] sm:$0x1] %v390
        %v392 = vld [vmem:[#allocation2 + $0xc] sm:$0xf]
        %v393 = vsel %vm381, %v351, %v392
        %394 = vst [vmem:[#allocation2 + $0xc] sm:$0xf] %v393
        %395 = vst.msk [vmem:[#allocation2 + $0x10] sm:$0xf] %vm385, %v353
        %v396 = vld [vmem:[#allocation2 + $0x14] sm:$0x1]
        %v397 = vsel %vm388, %v355, %v396
        %398 = vst [vmem:[#allocation2 + $0x14] sm:$0x1] %v397
        %v399 = vld [vmem:[#allocation2 + $0x18] sm:$0xf]
        %v400 = vsel %vm381, %v357, %v399
        %401 = vst [vmem:[#allocation2 + $0x18] sm:$0xf] %v400
        %402 = vst.msk [vmem:[#allocation2 + $0x1c] sm:$0xf] %vm385, %v359
        %v403 = vld [vmem:[#allocation2 + $0x20] sm:$0x1]
        %v404 = vsel %vm388, %v361, %v403
        %405 = vst [vmem:[#allocation2 + $0x20] sm:$0x1] %v404
        %v406 = vld [vmem:[#allocation2 + $0x24] sm:$0xf]
        %v407 = vsel %vm381, %v363, %v406
        %408 = vst [vmem:[#allocation2 + $0x24] sm:$0xf] %v407
        %409 = vst.msk [vmem:[#allocation2 + $0x28] sm:$0xf] %vm385, %v365
        %v410 = vld [vmem:[#allocation2 + $0x2c] sm:$0x1]
        %v411 = vsel %vm388, %v367, %v410
        %412 = vst [vmem:[#allocation2 + $0x2c] sm:$0x1] %v411
        %v413 = vld [vmem:[#allocation2] sm:$0xf]
        %v414 = vld [vmem:[#allocation2 + $0x4] sm:$0xf]
        %v415 = vld [vmem:[#allocation2 + $0x8] sm:$0x1]
        %v416 = vld [vmem:[#allocation2 + $0xc] sm:$0xf]
        %v417 = vld [vmem:[#allocation2 + $0x10] sm:$0xf]
        %v418 = vld [vmem:[#allocation2 + $0x14] sm:$0x1]
        %v419 = vld [vmem:[#allocation2 + $0x18] sm:$0xf]
        %v420 = vld [vmem:[#allocation2 + $0x1c] sm:$0xf]
        %v421 = vld [vmem:[#allocation2 + $0x20] sm:$0x1]
        %v422 = vld [vmem:[#allocation2 + $0x24] sm:$0xf]
        %v423 = vld [vmem:[#allocation2 + $0x28] sm:$0xf]
        %v424 = vld [vmem:[#allocation2 + $0x2c] sm:$0x1]
        %v427 = vpack.i.b16 %v416, %v413
        %v428 = vshrl.u32 %v413, 16
        %v429 = vshrl.u32 %v416, 16
        %v430 = vpack.i.b16 %v429, %v428
        %v433 = vpack.i.b16 %v422, %v419
        %v434 = vshrl.u32 %v419, 16
        %v435 = vshrl.u32 %v422, 16
        %v436 = vpack.i.b16 %v435, %v434
        %v439 = vpack.i.b16 %v417, %v414
        %v440 = vshrl.u32 %v414, 16
        %v441 = vshrl.u32 %v417, 16
        %v442 = vpack.i.b16 %v441, %v440
        %v445 = vpack.i.b16 %v423, %v420
        %v446 = vshrl.u32 %v420, 16
        %v447 = vshrl.u32 %v423, 16
        %v448 = vpack.i.b16 %v447, %v446
        %v451 = vunpack.c.l.s4 1983009808
        %v452 = vunpack.c.0.s8 %v451
        %v453 = vlaneseq
        %v454 = vshrl.u32 %v453, 7
        %v455 = vsub.s32 %v452, %v454
        %v456 = vrot.slane %v427, %v455
        %v459 = vunpack.c.l.s4 1983009808
        %v460 = vunpack.c.0.s8 %v459
        %v461 = vlaneseq
        %v462 = vshrl.u32 %v461, 7
        %v463 = vsub.s32 %v460, %v462
        %v464 = vrot.slane %v433, %v463
        %v465 = vcombine.low %v456, %v464
        %v466 = vcombine.high %v456, %v464
        %v468 = vunpack.c.l.s4 1934713408
        %v469 = vunpack.c.0.s8 %v468
        %v470 = vlaneseq
        %v471 = vshrl.u32 %v470, 7
        %v472 = vsub.s32 %v469, %v471
        %v473 = vrot.slane %v465, %v472
        %v475 = vunpack.c.l.s4 1934713408
        %v476 = vunpack.c.0.s8 %v475
        %v477 = vlaneseq
        %v478 = vshrl.u32 %v477, 7
        %v479 = vsub.s32 %v476, %v478
        %v480 = vrot.slane %v466, %v479
        %v481 = vcombine.high %v473, 0
        %v482 = vcombine.high %v480, 0
        %v485 = vunpack.c.l.s4 1983009808
        %v486 = vunpack.c.0.s8 %v485
        %v487 = vlaneseq
        %v488 = vshrl.u32 %v487, 7
        %v489 = vsub.s32 %v486, %v488
        %v490 = vrot.slane %v430, %v489
        %v493 = vunpack.c.l.s4 1983009808
        %v494 = vunpack.c.0.s8 %v493
        %v495 = vlaneseq
        %v496 = vshrl.u32 %v495, 7
        %v497 = vsub.s32 %v494, %v496
        %v498 = vrot.slane %v436, %v497
        %v499 = vcombine.low %v490, %v498
        %v500 = vcombine.high %v490, %v498
        %v502 = vunpack.c.l.s4 1934713408
        %v503 = vunpack.c.0.s8 %v502
        %v504 = vlaneseq
        %v505 = vshrl.u32 %v504, 7
        %v506 = vsub.s32 %v503, %v505
        %v507 = vrot.slane %v499, %v506
        %v509 = vunpack.c.l.s4 1934713408
        %v510 = vunpack.c.0.s8 %v509
        %v511 = vlaneseq
        %v512 = vshrl.u32 %v511, 7
        %v513 = vsub.s32 %v510, %v512
        %v514 = vrot.slane %v500, %v513
        %v515 = vcombine.high %v507, 0
        %v516 = vcombine.high %v514, 0
        %v519 = vunpack.c.l.s4 1983009808
        %v520 = vunpack.c.0.s8 %v519
        %v521 = vlaneseq
        %v522 = vshrl.u32 %v521, 7
        %v523 = vsub.s32 %v520, %v522
        %v524 = vrot.slane %v439, %v523
        %v527 = vunpack.c.l.s4 1983009808
        %v528 = vunpack.c.0.s8 %v527
        %v529 = vlaneseq
        %v530 = vshrl.u32 %v529, 7
        %v531 = vsub.s32 %v528, %v530
        %v532 = vrot.slane %v445, %v531
        %v533 = vcombine.low %v524, %v532
        %v534 = vcombine.high %v524, %v532
        %v536 = vunpack.c.l.s4 1934713408
        %v537 = vunpack.c.0.s8 %v536
        %v538 = vlaneseq
        %v539 = vshrl.u32 %v538, 7
        %v540 = vsub.s32 %v537, %v539
        %v541 = vrot.slane %v533, %v540
        %v543 = vunpack.c.l.s4 1934713408
        %v544 = vunpack.c.0.s8 %v543
        %v545 = vlaneseq
        %v546 = vshrl.u32 %v545, 7
        %v547 = vsub.s32 %v544, %v546
        %v548 = vrot.slane %v534, %v547
        %v549 = vcombine.high %v541, 0
        %v550 = vcombine.high %v548, 0
        %v553 = vunpack.c.l.s4 1983009808
        %v554 = vunpack.c.0.s8 %v553
        %v555 = vlaneseq
        %v556 = vshrl.u32 %v555, 7
        %v557 = vsub.s32 %v554, %v556
        %v558 = vrot.slane %v442, %v557
        %v561 = vunpack.c.l.s4 1983009808
        %v562 = vunpack.c.0.s8 %v561
        %v563 = vlaneseq
        %v564 = vshrl.u32 %v563, 7
        %v565 = vsub.s32 %v562, %v564
        %v566 = vrot.slane %v448, %v565
        %v567 = vcombine.low %v558, %v566
        %v568 = vcombine.high %v558, %v566
        %v570 = vunpack.c.l.s4 1934713408
        %v571 = vunpack.c.0.s8 %v570
        %v572 = vlaneseq
        %v573 = vshrl.u32 %v572, 7
        %v574 = vsub.s32 %v571, %v573
        %v575 = vrot.slane %v567, %v574
        %v577 = vunpack.c.l.s4 1934713408
        %v578 = vunpack.c.0.s8 %v577
        %v579 = vlaneseq
        %v580 = vshrl.u32 %v579, 7
        %v581 = vsub.s32 %v578, %v580
        %v582 = vrot.slane %v568, %v581
        %v583 = vcombine.high %v575, 0
        %v584 = vcombine.high %v582, 0
        %v586 = vunpack.c.l.b16 %v507
        %v587 = vpack.c.b16 %v586, %v586
        %588 = vrot.lane.b32.xlu0 %v587, 16
        %v589 = vpop.permute.xlu0 %588
        %v591 = vunpack.c.l.b16 %v481
        %v592 = vpack.c.b16 %v591, %v591
        %593 = vrot.lane.b32.xlu0 %v592, 32
        %v594 = vpop.permute.xlu0 %593
        %v596 = vunpack.c.l.b16 %v515
        %v597 = vpack.c.b16 %v596, %v596
        %598 = vrot.lane.b32.xlu0 %v597, 48
        %v599 = vpop.permute.xlu0 %598
        %v601 = vunpack.c.l.b16 %v480
        %v602 = vpack.c.b16 %v601, %v601
        %603 = vrot.lane.b32.xlu0 %v602, 64
        %v604 = vpop.permute.xlu0 %603
        %v606 = vunpack.c.l.b16 %v514
        %v607 = vpack.c.b16 %v606, %v606
        %608 = vrot.lane.b32.xlu0 %v607, 80
        %v609 = vpop.permute.xlu0 %608
        %v611 = vunpack.c.l.b16 %v482
        %v612 = vpack.c.b16 %v611, %v611
        %613 = vrot.lane.b32.xlu0 %v612, 96
        %v614 = vpop.permute.xlu0 %613
        %v616 = vunpack.c.l.b16 %v516
        %v617 = vpack.c.b16 %v616, %v616
        %618 = vrot.lane.b32.xlu0 %v617, 112
        %v619 = vpop.permute.xlu0 %618
        %v621 = vunpack.c.l.b16 %v575
        %v622 = vpack.c.b16 %v621, %v621
        %623 = vrot.lane.b32.xlu0 %v622, 16
        %v624 = vpop.permute.xlu0 %623
        %v626 = vunpack.c.l.b16 %v549
        %v627 = vpack.c.b16 %v626, %v626
        %628 = vrot.lane.b32.xlu0 %v627, 32
        %v629 = vpop.permute.xlu0 %628
        %v631 = vunpack.c.l.b16 %v583
        %v632 = vpack.c.b16 %v631, %v631
        %633 = vrot.lane.b32.xlu0 %v632, 48
        %v634 = vpop.permute.xlu0 %633
        %v636 = vunpack.c.l.b16 %v548
        %v637 = vpack.c.b16 %v636, %v636
        %638 = vrot.lane.b32.xlu0 %v637, 64
        %v639 = vpop.permute.xlu0 %638
        %v641 = vunpack.c.l.b16 %v582
        %v642 = vpack.c.b16 %v641, %v641
        %643 = vrot.lane.b32.xlu0 %v642, 80
        %v644 = vpop.permute.xlu0 %643
        %v646 = vunpack.c.l.b16 %v550
        %v647 = vpack.c.b16 %v646, %v646
        %648 = vrot.lane.b32.xlu0 %v647, 96
        %v649 = vpop.permute.xlu0 %648
        %v651 = vunpack.c.l.b16 %v584
        %v652 = vpack.c.b16 %v651, %v651
        %653 = vrot.lane.b32.xlu0 %v652, 112
        %v654 = vpop.permute.xlu0 %653
        %vm655 = vcmask 130048
        %v658 = vsel %vm655, %v473, %v589
        %vm659 = vcmask 261120
        %v661 = vsel %vm659, %v658, %v594
        %vm662 = vcmask 392192
        %v664 = vsel %vm662, %v661, %v599
        %vm665 = vcmask 523264
        %v667 = vsel %vm665, %v664, %v604
        %vm668 = vcmask 654336
        %v670 = vsel %vm668, %v667, %v609
        %vm671 = vcmask 785408
        %v673 = vsel %vm671, %v670, %v614
        %vm674 = vcmask 916480
        %v676 = vsel %vm674, %v673, %v619
        %v679 = vsel %vm655, %v541, %v624
        %v681 = vsel %vm659, %v679, %v629
        %v683 = vsel %vm662, %v681, %v634
        %v685 = vsel %vm665, %v683, %v639
        %v687 = vsel %vm668, %v685, %v644
        %v689 = vsel %vm671, %v687, %v649
        %v691 = vsel %vm674, %v689, %v654
        %v694 = vunpack.c.l.b16 %v676
        %v695 = vunpack.c.l.b16 %v691
        %v696 = vpack.c.b16 %v695, %v694
        %698 = vst [vmem:[#allocation3] sm:$0x33] %v696
        %707 = vrot.lane.b32.xlu0 %v413, 127
        %v708 = vpop.permute.xlu0 %707
        %709 = vrot.lane.b32.xlu0 %v414, 127
        %v710 = vpop.permute.xlu0 %709
        %711 = vrot.lane.b32.xlu0 %v416, 127
        %v712 = vpop.permute.xlu0 %711
        %713 = vrot.lane.b32.xlu0 %v417, 127
        %v714 = vpop.permute.xlu0 %713
        %715 = vrot.lane.b32.xlu0 %v419, 127
        %v716 = vpop.permute.xlu0 %715
        %717 = vrot.lane.b32.xlu0 %v420, 127
        %v718 = vpop.permute.xlu0 %717
        %719 = vrot.lane.b32.xlu0 %v422, 127
        %v720 = vpop.permute.xlu0 %719
        %721 = vrot.lane.b32.xlu0 %v423, 127
        %v722 = vpop.permute.xlu0 %721
        %v725 = vpack.i.b16 %v712, %v708
        %v726 = vshrl.u32 %v708, 16
        %v727 = vshrl.u32 %v712, 16
        %v728 = vpack.i.b16 %v727, %v726
        %v731 = vpack.i.b16 %v720, %v716
        %v732 = vshrl.u32 %v716, 16
        %v733 = vshrl.u32 %v720, 16
        %v734 = vpack.i.b16 %v733, %v732
        %v737 = vpack.i.b16 %v714, %v710
        %v738 = vshrl.u32 %v710, 16
        %v739 = vshrl.u32 %v714, 16
        %v740 = vpack.i.b16 %v739, %v738
        %v743 = vpack.i.b16 %v722, %v718
        %v744 = vshrl.u32 %v718, 16
        %v745 = vshrl.u32 %v722, 16
        %v746 = vpack.i.b16 %v745, %v744
        %v749 = vunpack.c.l.s4 1983009808
        %v750 = vunpack.c.0.s8 %v749
        %v751 = vlaneseq
        %v752 = vshrl.u32 %v751, 7
        %v753 = vsub.s32 %v750, %v752
        %v754 = vrot.slane %v725, %v753
        %v757 = vunpack.c.l.s4 1983009808
        %v758 = vunpack.c.0.s8 %v757
        %v759 = vlaneseq
        %v760 = vshrl.u32 %v759, 7
        %v761 = vsub.s32 %v758, %v760
        %v762 = vrot.slane %v731, %v761
        %v763 = vcombine.low %v754, %v762
        %v764 = vcombine.high %v754, %v762
        %v766 = vunpack.c.l.s4 1934713408
        %v767 = vunpack.c.0.s8 %v766
        %v768 = vlaneseq
        %v769 = vshrl.u32 %v768, 7
        %v770 = vsub.s32 %v767, %v769
        %v771 = vrot.slane %v763, %v770
        %v773 = vunpack.c.l.s4 1934713408
        %v774 = vunpack.c.0.s8 %v773
        %v775 = vlaneseq
        %v776 = vshrl.u32 %v775, 7
        %v777 = vsub.s32 %v774, %v776
        %v778 = vrot.slane %v764, %v777
        %v779 = vcombine.high %v771, 0
        %v780 = vcombine.high %v778, 0
        %v783 = vunpack.c.l.s4 1983009808
        %v784 = vunpack.c.0.s8 %v783
        %v785 = vlaneseq
        %v786 = vshrl.u32 %v785, 7
        %v787 = vsub.s32 %v784, %v786
        %v788 = vrot.slane %v728, %v787
        %v791 = vunpack.c.l.s4 1983009808
        %v792 = vunpack.c.0.s8 %v791
        %v793 = vlaneseq
        %v794 = vshrl.u32 %v793, 7
        %v795 = vsub.s32 %v792, %v794
        %v796 = vrot.slane %v734, %v795
        %v797 = vcombine.low %v788, %v796
        %v798 = vcombine.high %v788, %v796
        %v800 = vunpack.c.l.s4 1934713408
        %v801 = vunpack.c.0.s8 %v800
        %v802 = vlaneseq
        %v803 = vshrl.u32 %v802, 7
        %v804 = vsub.s32 %v801, %v803
        %v805 = vrot.slane %v797, %v804
        %v807 = vunpack.c.l.s4 1934713408
        %v808 = vunpack.c.0.s8 %v807
        %v809 = vlaneseq
        %v810 = vshrl.u32 %v809, 7
        %v811 = vsub.s32 %v808, %v810
        %v812 = vrot.slane %v798, %v811
        %v813 = vcombine.high %v805, 0
        %v814 = vcombine.high %v812, 0
        %v817 = vunpack.c.l.s4 1983009808
        %v818 = vunpack.c.0.s8 %v817
        %v819 = vlaneseq
        %v820 = vshrl.u32 %v819, 7
        %v821 = vsub.s32 %v818, %v820
        %v822 = vrot.slane %v737, %v821
        %v825 = vunpack.c.l.s4 1983009808
        %v826 = vunpack.c.0.s8 %v825
        %v827 = vlaneseq
        %v828 = vshrl.u32 %v827, 7
        %v829 = vsub.s32 %v826, %v828
        %v830 = vrot.slane %v743, %v829
        %v831 = vcombine.low %v822, %v830
        %v832 = vcombine.high %v822, %v830
        %v834 = vunpack.c.l.s4 1934713408
        %v835 = vunpack.c.0.s8 %v834
        %v836 = vlaneseq
        %v837 = vshrl.u32 %v836, 7
        %v838 = vsub.s32 %v835, %v837
        %v839 = vrot.slane %v831, %v838
        %v841 = vunpack.c.l.s4 1934713408
        %v842 = vunpack.c.0.s8 %v841
        %v843 = vlaneseq
        %v844 = vshrl.u32 %v843, 7
        %v845 = vsub.s32 %v842, %v844
        %v846 = vrot.slane %v832, %v845
        %v847 = vcombine.high %v839, 0
        %v848 = vcombine.high %v846, 0
        %v851 = vunpack.c.l.s4 1983009808
        %v852 = vunpack.c.0.s8 %v851
        %v853 = vlaneseq
        %v854 = vshrl.u32 %v853, 7
        %v855 = vsub.s32 %v852, %v854
        %v856 = vrot.slane %v740, %v855
        %v859 = vunpack.c.l.s4 1983009808
        %v860 = vunpack.c.0.s8 %v859
        %v861 = vlaneseq
        %v862 = vshrl.u32 %v861, 7
        %v863 = vsub.s32 %v860, %v862
        %v864 = vrot.slane %v746, %v863
        %v865 = vcombine.low %v856, %v864
        %v866 = vcombine.high %v856, %v864
        %v868 = vunpack.c.l.s4 1934713408
        %v869 = vunpack.c.0.s8 %v868
        %v870 = vlaneseq
        %v871 = vshrl.u32 %v870, 7
        %v872 = vsub.s32 %v869, %v871
        %v873 = vrot.slane %v865, %v872
        %v875 = vunpack.c.l.s4 1934713408
        %v876 = vunpack.c.0.s8 %v875
        %v877 = vlaneseq
        %v878 = vshrl.u32 %v877, 7
        %v879 = vsub.s32 %v876, %v878
        %v880 = vrot.slane %v866, %v879
        %v881 = vcombine.high %v873, 0
        %v882 = vcombine.high %v880, 0
        %v884 = vunpack.c.l.b16 %v805
        %v885 = vpack.c.b16 %v884, %v884
        %886 = vrot.lane.b32.xlu0 %v885, 16
        %v887 = vpop.permute.xlu0 %886
        %v889 = vunpack.c.l.b16 %v779
        %v890 = vpack.c.b16 %v889, %v889
        %891 = vrot.lane.b32.xlu0 %v890, 32
        %v892 = vpop.permute.xlu0 %891
        %v894 = vunpack.c.l.b16 %v813
        %v895 = vpack.c.b16 %v894, %v894
        %896 = vrot.lane.b32.xlu0 %v895, 48
        %v897 = vpop.permute.xlu0 %896
        %v899 = vunpack.c.l.b16 %v778
        %v900 = vpack.c.b16 %v899, %v899
        %901 = vrot.lane.b32.xlu0 %v900, 64
        %v902 = vpop.permute.xlu0 %901
        %v904 = vunpack.c.l.b16 %v812
        %v905 = vpack.c.b16 %v904, %v904
        %906 = vrot.lane.b32.xlu0 %v905, 80
        %v907 = vpop.permute.xlu0 %906
        %v909 = vunpack.c.l.b16 %v780
        %v910 = vpack.c.b16 %v909, %v909
        %911 = vrot.lane.b32.xlu0 %v910, 96
        %v912 = vpop.permute.xlu0 %911
        %v914 = vunpack.c.l.b16 %v814
        %v915 = vpack.c.b16 %v914, %v914
        %916 = vrot.lane.b32.xlu0 %v915, 112
        %v917 = vpop.permute.xlu0 %916
        %v919 = vunpack.c.l.b16 %v873
        %v920 = vpack.c.b16 %v919, %v919
        %921 = vrot.lane.b32.xlu0 %v920, 16
        %v922 = vpop.permute.xlu0 %921
        %v924 = vunpack.c.l.b16 %v847
        %v925 = vpack.c.b16 %v924, %v924
        %926 = vrot.lane.b32.xlu0 %v925, 32
        %v927 = vpop.permute.xlu0 %926
        %v929 = vunpack.c.l.b16 %v881
        %v930 = vpack.c.b16 %v929, %v929
        %931 = vrot.lane.b32.xlu0 %v930, 48
        %v932 = vpop.permute.xlu0 %931
        %v934 = vunpack.c.l.b16 %v846
        %v935 = vpack.c.b16 %v934, %v934
        %936 = vrot.lane.b32.xlu0 %v935, 64
        %v937 = vpop.permute.xlu0 %936
        %v939 = vunpack.c.l.b16 %v880
        %v940 = vpack.c.b16 %v939, %v939
        %941 = vrot.lane.b32.xlu0 %v940, 80
        %v942 = vpop.permute.xlu0 %941
        %v944 = vunpack.c.l.b16 %v848
        %v945 = vpack.c.b16 %v944, %v944
        %946 = vrot.lane.b32.xlu0 %v945, 96
        %v947 = vpop.permute.xlu0 %946
        %v949 = vunpack.c.l.b16 %v882
        %v950 = vpack.c.b16 %v949, %v949
        %951 = vrot.lane.b32.xlu0 %v950, 112
        %v952 = vpop.permute.xlu0 %951
        %v955 = vsel %vm655, %v771, %v887
        %v957 = vsel %vm659, %v955, %v892
        %v959 = vsel %vm662, %v957, %v897
        %v961 = vsel %vm665, %v959, %v902
        %v963 = vsel %vm668, %v961, %v907
        %v965 = vsel %vm671, %v963, %v912
        %v967 = vsel %vm674, %v965, %v917
        %v970 = vsel %vm655, %v839, %v922
        %v972 = vsel %vm659, %v970, %v927
        %v974 = vsel %vm662, %v972, %v932
        %v976 = vsel %vm665, %v974, %v937
        %v978 = vsel %vm668, %v976, %v942
        %v980 = vsel %vm671, %v978, %v947
        %v982 = vsel %vm674, %v980, %v952
        %v985 = vunpack.c.l.b16 %v967
        %v986 = vunpack.c.l.b16 %v982
        %v987 = vpack.c.b16 %v986, %v985
        %v988 = vrot.slane %v987, 6
        %990 = vst [vmem:[#allocation3] sm:$0xcc] %v988
        %991 = vrot.lane.b32.xlu0 %v413, 126
        %v992 = vpop.permute.xlu0 %991
        %993 = vrot.lane.b32.xlu0 %v414, 126
        %v994 = vpop.permute.xlu0 %993
        %995 = vrot.lane.b32.xlu0 %v416, 126
        %v996 = vpop.permute.xlu0 %995
        %997 = vrot.lane.b32.xlu0 %v417, 126
        %v998 = vpop.permute.xlu0 %997
        %999 = vrot.lane.b32.xlu0 %v419, 126
        %v1000 = vpop.permute.xlu0 %999
        %1001 = vrot.lane.b32.xlu0 %v420, 126
        %v1002 = vpop.permute.xlu0 %1001
        %1003 = vrot.lane.b32.xlu0 %v422, 126
        %v1004 = vpop.permute.xlu0 %1003
        %1005 = vrot.lane.b32.xlu0 %v423, 126
        %v1006 = vpop.permute.xlu0 %1005
        %v1009 = vpack.i.b16 %v996, %v992
        %v1010 = vshrl.u32 %v992, 16
        %v1011 = vshrl.u32 %v996, 16
        %v1012 = vpack.i.b16 %v1011, %v1010
        %v1015 = vpack.i.b16 %v1004, %v1000
        %v1016 = vshrl.u32 %v1000, 16
        %v1017 = vshrl.u32 %v1004, 16
        %v1018 = vpack.i.b16 %v1017, %v1016
        %v1021 = vpack.i.b16 %v998, %v994
        %v1022 = vshrl.u32 %v994, 16
        %v1023 = vshrl.u32 %v998, 16
        %v1024 = vpack.i.b16 %v1023, %v1022
        %v1027 = vpack.i.b16 %v1006, %v1002
        %v1028 = vshrl.u32 %v1002, 16
        %v1029 = vshrl.u32 %v1006, 16
        %v1030 = vpack.i.b16 %v1029, %v1028
        %v1033 = vunpack.c.l.s4 1983009808
        %v1034 = vunpack.c.0.s8 %v1033
        %v1035 = vlaneseq
        %v1036 = vshrl.u32 %v1035, 7
        %v1037 = vsub.s32 %v1034, %v1036
        %v1038 = vrot.slane %v1009, %v1037
        %v1041 = vunpack.c.l.s4 1983009808
        %v1042 = vunpack.c.0.s8 %v1041
        %v1043 = vlaneseq
        %v1044 = vshrl.u32 %v1043, 7
        %v1045 = vsub.s32 %v1042, %v1044
        %v1046 = vrot.slane %v1015, %v1045
        %v1047 = vcombine.low %v1038, %v1046
        %v1048 = vcombine.high %v1038, %v1046
        %v1050 = vunpack.c.l.s4 1934713408
        %v1051 = vunpack.c.0.s8 %v1050
        %v1052 = vlaneseq
        %v1053 = vshrl.u32 %v1052, 7
        %v1054 = vsub.s32 %v1051, %v1053
        %v1055 = vrot.slane %v1047, %v1054
        %v1057 = vunpack.c.l.s4 1934713408
        %v1058 = vunpack.c.0.s8 %v1057
        %v1059 = vlaneseq
        %v1060 = vshrl.u32 %v1059, 7
        %v1061 = vsub.s32 %v1058, %v1060
        %v1062 = vrot.slane %v1048, %v1061
        %v1063 = vcombine.high %v1055, 0
        %v1064 = vcombine.high %v1062, 0
        %v1067 = vunpack.c.l.s4 1983009808
        %v1068 = vunpack.c.0.s8 %v1067
        %v1069 = vlaneseq
        %v1070 = vshrl.u32 %v1069, 7
        %v1071 = vsub.s32 %v1068, %v1070
        %v1072 = vrot.slane %v1012, %v1071
        %v1075 = vunpack.c.l.s4 1983009808
        %v1076 = vunpack.c.0.s8 %v1075
        %v1077 = vlaneseq
        %v1078 = vshrl.u32 %v1077, 7
        %v1079 = vsub.s32 %v1076, %v1078
        %v1080 = vrot.slane %v1018, %v1079
        %v1081 = vcombine.low %v1072, %v1080
        %v1082 = vcombine.high %v1072, %v1080
        %v1084 = vunpack.c.l.s4 1934713408
        %v1085 = vunpack.c.0.s8 %v1084
        %v1086 = vlaneseq
        %v1087 = vshrl.u32 %v1086, 7
        %v1088 = vsub.s32 %v1085, %v1087
        %v1089 = vrot.slane %v1081, %v1088
        %v1091 = vunpack.c.l.s4 1934713408
        %v1092 = vunpack.c.0.s8 %v1091
        %v1093 = vlaneseq
        %v1094 = vshrl.u32 %v1093, 7
        %v1095 = vsub.s32 %v1092, %v1094
        %v1096 = vrot.slane %v1082, %v1095
        %v1097 = vcombine.high %v1089, 0
        %v1098 = vcombine.high %v1096, 0
        %v1101 = vunpack.c.l.s4 1983009808
        %v1102 = vunpack.c.0.s8 %v1101
        %v1103 = vlaneseq
        %v1104 = vshrl.u32 %v1103, 7
        %v1105 = vsub.s32 %v1102, %v1104
        %v1106 = vrot.slane %v1021, %v1105
        %v1109 = vunpack.c.l.s4 1983009808
        %v1110 = vunpack.c.0.s8 %v1109
        %v1111 = vlaneseq
        %v1112 = vshrl.u32 %v1111, 7
        %v1113 = vsub.s32 %v1110, %v1112
        %v1114 = vrot.slane %v1027, %v1113
        %v1115 = vcombine.low %v1106, %v1114
        %v1116 = vcombine.high %v1106, %v1114
        %v1118 = vunpack.c.l.s4 1934713408
        %v1119 = vunpack.c.0.s8 %v1118
        %v1120 = vlaneseq
        %v1121 = vshrl.u32 %v1120, 7
        %v1122 = vsub.s32 %v1119, %v1121
        %v1123 = vrot.slane %v1115, %v1122
        %v1125 = vunpack.c.l.s4 1934713408
        %v1126 = vunpack.c.0.s8 %v1125
        %v1127 = vlaneseq
        %v1128 = vshrl.u32 %v1127, 7
        %v1129 = vsub.s32 %v1126, %v1128
        %v1130 = vrot.slane %v1116, %v1129
        %v1131 = vcombine.high %v1123, 0
        %v1132 = vcombine.high %v1130, 0
        %v1135 = vunpack.c.l.s4 1983009808
        %v1136 = vunpack.c.0.s8 %v1135
        %v1137 = vlaneseq
        %v1138 = vshrl.u32 %v1137, 7
        %v1139 = vsub.s32 %v1136, %v1138
        %v1140 = vrot.slane %v1024, %v1139
        %v1143 = vunpack.c.l.s4 1983009808
        %v1144 = vunpack.c.0.s8 %v1143
        %v1145 = vlaneseq
        %v1146 = vshrl.u32 %v1145, 7
        %v1147 = vsub.s32 %v1144, %v1146
        %v1148 = vrot.slane %v1030, %v1147
        %v1149 = vcombine.low %v1140, %v1148
        %v1150 = vcombine.high %v1140, %v1148
        %v1152 = vunpack.c.l.s4 1934713408
        %v1153 = vunpack.c.0.s8 %v1152
        %v1154 = vlaneseq
        %v1155 = vshrl.u32 %v1154, 7
        %v1156 = vsub.s32 %v1153, %v1155
        %v1157 = vrot.slane %v1149, %v1156
        %v1159 = vunpack.c.l.s4 1934713408
        %v1160 = vunpack.c.0.s8 %v1159
        %v1161 = vlaneseq
        %v1162 = vshrl.u32 %v1161, 7
        %v1163 = vsub.s32 %v1160, %v1162
        %v1164 = vrot.slane %v1150, %v1163
        %v1165 = vcombine.high %v1157, 0
        %v1166 = vcombine.high %v1164, 0
        %v1168 = vunpack.c.l.b16 %v1089
        %v1169 = vpack.c.b16 %v1168, %v1168
        %1170 = vrot.lane.b32.xlu0 %v1169, 16
        %v1171 = vpop.permute.xlu0 %1170
        %v1173 = vunpack.c.l.b16 %v1063
        %v1174 = vpack.c.b16 %v1173, %v1173
        %1175 = vrot.lane.b32.xlu0 %v1174, 32
        %v1176 = vpop.permute.xlu0 %1175
        %v1178 = vunpack.c.l.b16 %v1097
        %v1179 = vpack.c.b16 %v1178, %v1178
        %1180 = vrot.lane.b32.xlu0 %v1179, 48
        %v1181 = vpop.permute.xlu0 %1180
        %v1183 = vunpack.c.l.b16 %v1062
        %v1184 = vpack.c.b16 %v1183, %v1183
        %1185 = vrot.lane.b32.xlu0 %v1184, 64
        %v1186 = vpop.permute.xlu0 %1185
        %v1188 = vunpack.c.l.b16 %v1096
        %v1189 = vpack.c.b16 %v1188, %v1188
        %1190 = vrot.lane.b32.xlu0 %v1189, 80
        %v1191 = vpop.permute.xlu0 %1190
        %v1193 = vunpack.c.l.b16 %v1064
        %v1194 = vpack.c.b16 %v1193, %v1193
        %1195 = vrot.lane.b32.xlu0 %v1194, 96
        %v1196 = vpop.permute.xlu0 %1195
        %v1198 = vunpack.c.l.b16 %v1098
        %v1199 = vpack.c.b16 %v1198, %v1198
        %1200 = vrot.lane.b32.xlu0 %v1199, 112
        %v1201 = vpop.permute.xlu0 %1200
        %v1203 = vunpack.c.l.b16 %v1157
        %v1204 = vpack.c.b16 %v1203, %v1203
        %1205 = vrot.lane.b32.xlu0 %v1204, 16
        %v1206 = vpop.permute.xlu0 %1205
        %v1208 = vunpack.c.l.b16 %v1131
        %v1209 = vpack.c.b16 %v1208, %v1208
        %1210 = vrot.lane.b32.xlu0 %v1209, 32
        %v1211 = vpop.permute.xlu0 %1210
        %v1213 = vunpack.c.l.b16 %v1165
        %v1214 = vpack.c.b16 %v1213, %v1213
        %1215 = vrot.lane.b32.xlu0 %v1214, 48
        %v1216 = vpop.permute.xlu0 %1215
        %v1218 = vunpack.c.l.b16 %v1130
        %v1219 = vpack.c.b16 %v1218, %v1218
        %1220 = vrot.lane.b32.xlu0 %v1219, 64
        %v1221 = vpop.permute.xlu0 %1220
        %v1223 = vunpack.c.l.b16 %v1164
        %v1224 = vpack.c.b16 %v1223, %v1223
        %1225 = vrot.lane.b32.xlu0 %v1224, 80
        %v1226 = vpop.permute.xlu0 %1225
        %v1228 = vunpack.c.l.b16 %v1132
        %v1229 = vpack.c.b16 %v1228, %v1228
        %1230 = vrot.lane.b32.xlu0 %v1229, 96
        %v1231 = vpop.permute.xlu0 %1230
        %v1233 = vunpack.c.l.b16 %v1166
        %v1234 = vpack.c.b16 %v1233, %v1233
        %1235 = vrot.lane.b32.xlu0 %v1234, 112
        %v1236 = vpop.permute.xlu0 %1235
        %v1239 = vsel %vm655, %v1055, %v1171
        %v1241 = vsel %vm659, %v1239, %v1176
        %v1243 = vsel %vm662, %v1241, %v1181
        %v1245 = vsel %vm665, %v1243, %v1186
        %v1247 = vsel %vm668, %v1245, %v1191
        %v1249 = vsel %vm671, %v1247, %v1196
        %v1251 = vsel %vm674, %v1249, %v1201
        %v1254 = vsel %vm655, %v1123, %v1206
        %v1256 = vsel %vm659, %v1254, %v1211
        %v1258 = vsel %vm662, %v1256, %v1216
        %v1260 = vsel %vm665, %v1258, %v1221
        %v1262 = vsel %vm668, %v1260, %v1226
        %v1264 = vsel %vm671, %v1262, %v1231
        %v1266 = vsel %vm674, %v1264, %v1236
        %v1269 = vunpack.c.l.b16 %v1251
        %v1270 = vunpack.c.l.b16 %v1266
        %v1271 = vpack.c.b16 %v1270, %v1269
        %1273 = vst [vmem:[#allocation3 + $0x8] sm:$0x33] %v1271
        %vm1274 = vsmask.f32 3328
        %vm1275 = vsmask.f32 7440
        %vm1276 = vmor %vm1274, %vm1275
        %v1278 = vrot.slane %v428, 4
        %v1279 = vshll.u32 %v413, 16
        %v1281 = vrot.slane %v1279, 5
        %v1282 = vor.u32 %v1278, %v1281
        %v1283 = vrot.slane %v1282, 4
        %v1284 = vshll.u32 %v414, 16
        %v1286 = vrot.slane %v1284, 5
        %v1287 = vsel %vm1276, %v1283, %v1286
        %v1289 = vrot.slane %v440, 4
        %v1290 = vor.u32 %v1289, %v1286
        %v1291 = vrot.slane %v1290, 4
        %v1293 = vshll.u32 %v415, 16
        %v1295 = vrot.slane %v1293, 5
        %v1296 = vsel %vm1276, %v1291, %v1295
        %v1298 = vrot.slane %v429, 4
        %v1299 = vshll.u32 %v416, 16
        %v1301 = vrot.slane %v1299, 5
        %v1302 = vor.u32 %v1298, %v1301
        %v1303 = vrot.slane %v1302, 4
        %v1304 = vshll.u32 %v417, 16
        %v1306 = vrot.slane %v1304, 5
        %v1307 = vsel %vm1276, %v1303, %v1306
        %v1309 = vrot.slane %v441, 4
        %v1310 = vor.u32 %v1309, %v1306
        %v1311 = vrot.slane %v1310, 4
        %v1313 = vshll.u32 %v418, 16
        %v1315 = vrot.slane %v1313, 5
        %v1316 = vsel %vm1276, %v1311, %v1315
        %v1318 = vrot.slane %v434, 4
        %v1319 = vshll.u32 %v419, 16
        %v1321 = vrot.slane %v1319, 5
        %v1322 = vor.u32 %v1318, %v1321
        %v1323 = vrot.slane %v1322, 4
        %v1324 = vshll.u32 %v420, 16
        %v1326 = vrot.slane %v1324, 5
        %v1327 = vsel %vm1276, %v1323, %v1326
        %v1329 = vrot.slane %v446, 4
        %v1330 = vor.u32 %v1329, %v1326
        %v1331 = vrot.slane %v1330, 4
        %v1333 = vshll.u32 %v421, 16
        %v1335 = vrot.slane %v1333, 5
        %v1336 = vsel %vm1276, %v1331, %v1335
        %v1338 = vrot.slane %v435, 4
        %v1339 = vshll.u32 %v422, 16
        %v1341 = vrot.slane %v1339, 5
        %v1342 = vor.u32 %v1338, %v1341
        %v1343 = vrot.slane %v1342, 4
        %v1344 = vshll.u32 %v423, 16
        %v1346 = vrot.slane %v1344, 5
        %v1347 = vsel %vm1276, %v1343, %v1346
        %v1349 = vrot.slane %v447, 4
        %v1350 = vor.u32 %v1349, %v1346
        %v1351 = vrot.slane %v1350, 4
        %v1353 = vshll.u32 %v424, 16
        %v1355 = vrot.slane %v1353, 5
        %v1356 = vsel %vm1276, %v1351, %v1355
        %v1359 = vpack.i.b16 %v1307, %v1287
        %v1360 = vshrl.u32 %v1287, 16
        %v1361 = vshrl.u32 %v1307, 16
        %v1362 = vpack.i.b16 %v1361, %v1360
        %v1365 = vpack.i.b16 %v1347, %v1327
        %v1366 = vshrl.u32 %v1327, 16
        %v1367 = vshrl.u32 %v1347, 16
        %v1368 = vpack.i.b16 %v1367, %v1366
        %v1371 = vpack.i.b16 %v1316, %v1296
        %v1372 = vshrl.u32 %v1296, 16
        %v1373 = vshrl.u32 %v1316, 16
        %v1374 = vpack.i.b16 %v1373, %v1372
        %v1377 = vpack.i.b16 %v1356, %v1336
        %v1378 = vshrl.u32 %v1336, 16
        %v1379 = vshrl.u32 %v1356, 16
        %v1380 = vpack.i.b16 %v1379, %v1378
        %v1383 = vunpack.c.l.s4 1983009808
        %v1384 = vunpack.c.0.s8 %v1383
        %v1385 = vlaneseq
        %v1386 = vshrl.u32 %v1385, 7
        %v1387 = vsub.s32 %v1384, %v1386
        %v1388 = vrot.slane %v1359, %v1387
        %v1391 = vunpack.c.l.s4 1983009808
        %v1392 = vunpack.c.0.s8 %v1391
        %v1393 = vlaneseq
        %v1394 = vshrl.u32 %v1393, 7
        %v1395 = vsub.s32 %v1392, %v1394
        %v1396 = vrot.slane %v1365, %v1395
        %v1397 = vcombine.low %v1388, %v1396
        %v1398 = vcombine.high %v1388, %v1396
        %v1400 = vunpack.c.l.s4 1934713408
        %v1401 = vunpack.c.0.s8 %v1400
        %v1402 = vlaneseq
        %v1403 = vshrl.u32 %v1402, 7
        %v1404 = vsub.s32 %v1401, %v1403
        %v1405 = vrot.slane %v1397, %v1404
        %v1407 = vunpack.c.l.s4 1934713408
        %v1408 = vunpack.c.0.s8 %v1407
        %v1409 = vlaneseq
        %v1410 = vshrl.u32 %v1409, 7
        %v1411 = vsub.s32 %v1408, %v1410
        %v1412 = vrot.slane %v1398, %v1411
        %v1413 = vcombine.high %v1405, 0
        %v1414 = vcombine.high %v1412, 0
        %v1417 = vunpack.c.l.s4 1983009808
        %v1418 = vunpack.c.0.s8 %v1417
        %v1419 = vlaneseq
        %v1420 = vshrl.u32 %v1419, 7
        %v1421 = vsub.s32 %v1418, %v1420
        %v1422 = vrot.slane %v1362, %v1421
        %v1425 = vunpack.c.l.s4 1983009808
        %v1426 = vunpack.c.0.s8 %v1425
        %v1427 = vlaneseq
        %v1428 = vshrl.u32 %v1427, 7
        %v1429 = vsub.s32 %v1426, %v1428
        %v1430 = vrot.slane %v1368, %v1429
        %v1431 = vcombine.low %v1422, %v1430
        %v1432 = vcombine.high %v1422, %v1430
        %v1434 = vunpack.c.l.s4 1934713408
        %v1435 = vunpack.c.0.s8 %v1434
        %v1436 = vlaneseq
        %v1437 = vshrl.u32 %v1436, 7
        %v1438 = vsub.s32 %v1435, %v1437
        %v1439 = vrot.slane %v1431, %v1438
        %v1441 = vunpack.c.l.s4 1934713408
        %v1442 = vunpack.c.0.s8 %v1441
        %v1443 = vlaneseq
        %v1444 = vshrl.u32 %v1443, 7
        %v1445 = vsub.s32 %v1442, %v1444
        %v1446 = vrot.slane %v1432, %v1445
        %v1447 = vcombine.high %v1439, 0
        %v1448 = vcombine.high %v1446, 0
        %v1451 = vunpack.c.l.s4 1983009808
        %v1452 = vunpack.c.0.s8 %v1451
        %v1453 = vlaneseq
        %v1454 = vshrl.u32 %v1453, 7
        %v1455 = vsub.s32 %v1452, %v1454
        %v1456 = vrot.slane %v1371, %v1455
        %v1459 = vunpack.c.l.s4 1983009808
        %v1460 = vunpack.c.0.s8 %v1459
        %v1461 = vlaneseq
        %v1462 = vshrl.u32 %v1461, 7
        %v1463 = vsub.s32 %v1460, %v1462
        %v1464 = vrot.slane %v1377, %v1463
        %v1465 = vcombine.low %v1456, %v1464
        %v1466 = vcombine.high %v1456, %v1464
        %v1468 = vunpack.c.l.s4 1934713408
        %v1469 = vunpack.c.0.s8 %v1468
        %v1470 = vlaneseq
        %v1471 = vshrl.u32 %v1470, 7
        %v1472 = vsub.s32 %v1469, %v1471
        %v1473 = vrot.slane %v1465, %v1472
        %v1475 = vunpack.c.l.s4 1934713408
        %v1476 = vunpack.c.0.s8 %v1475
        %v1477 = vlaneseq
        %v1478 = vshrl.u32 %v1477, 7
        %v1479 = vsub.s32 %v1476, %v1478
        %v1480 = vrot.slane %v1466, %v1479
        %v1481 = vcombine.high %v1473, 0
        %v1482 = vcombine.high %v1480, 0
        %v1485 = vunpack.c.l.s4 1983009808
        %v1486 = vunpack.c.0.s8 %v1485
        %v1487 = vlaneseq
        %v1488 = vshrl.u32 %v1487, 7
        %v1489 = vsub.s32 %v1486, %v1488
        %v1490 = vrot.slane %v1374, %v1489
        %v1493 = vunpack.c.l.s4 1983009808
        %v1494 = vunpack.c.0.s8 %v1493
        %v1495 = vlaneseq
        %v1496 = vshrl.u32 %v1495, 7
        %v1497 = vsub.s32 %v1494, %v1496
        %v1498 = vrot.slane %v1380, %v1497
        %v1499 = vcombine.low %v1490, %v1498
        %v1500 = vcombine.high %v1490, %v1498
        %v1502 = vunpack.c.l.s4 1934713408
        %v1503 = vunpack.c.0.s8 %v1502
        %v1504 = vlaneseq
        %v1505 = vshrl.u32 %v1504, 7
        %v1506 = vsub.s32 %v1503, %v1505
        %v1507 = vrot.slane %v1499, %v1506
        %v1509 = vunpack.c.l.s4 1934713408
        %v1510 = vunpack.c.0.s8 %v1509
        %v1511 = vlaneseq
        %v1512 = vshrl.u32 %v1511, 7
        %v1513 = vsub.s32 %v1510, %v1512
        %v1514 = vrot.slane %v1500, %v1513
        %v1515 = vcombine.high %v1507, 0
        %v1516 = vcombine.high %v1514, 0
        %v1518 = vunpack.c.l.b16 %v1439
        %v1519 = vpack.c.b16 %v1518, %v1518
        %1520 = vrot.lane.b32.xlu0 %v1519, 16
        %v1521 = vpop.permute.xlu0 %1520
        %v1523 = vunpack.c.l.b16 %v1413
        %v1524 = vpack.c.b16 %v1523, %v1523
        %1525 = vrot.lane.b32.xlu0 %v1524, 32
        %v1526 = vpop.permute.xlu0 %1525
        %v1528 = vunpack.c.l.b16 %v1447
        %v1529 = vpack.c.b16 %v1528, %v1528
        %1530 = vrot.lane.b32.xlu0 %v1529, 48
        %v1531 = vpop.permute.xlu0 %1530
        %v1533 = vunpack.c.l.b16 %v1412
        %v1534 = vpack.c.b16 %v1533, %v1533
        %1535 = vrot.lane.b32.xlu0 %v1534, 64
        %v1536 = vpop.permute.xlu0 %1535
        %v1538 = vunpack.c.l.b16 %v1446
        %v1539 = vpack.c.b16 %v1538, %v1538
        %1540 = vrot.lane.b32.xlu0 %v1539, 80
        %v1541 = vpop.permute.xlu0 %1540
        %v1543 = vunpack.c.l.b16 %v1414
        %v1544 = vpack.c.b16 %v1543, %v1543
        %1545 = vrot.lane.b32.xlu0 %v1544, 96
        %v1546 = vpop.permute.xlu0 %1545
        %v1548 = vunpack.c.l.b16 %v1448
        %v1549 = vpack.c.b16 %v1548, %v1548
        %1550 = vrot.lane.b32.xlu0 %v1549, 112
        %v1551 = vpop.permute.xlu0 %1550
        %v1553 = vunpack.c.l.b16 %v1507
        %v1554 = vpack.c.b16 %v1553, %v1553
        %1555 = vrot.lane.b32.xlu0 %v1554, 16
        %v1556 = vpop.permute.xlu0 %1555
        %v1558 = vunpack.c.l.b16 %v1481
        %v1559 = vpack.c.b16 %v1558, %v1558
        %1560 = vrot.lane.b32.xlu0 %v1559, 32
        %v1561 = vpop.permute.xlu0 %1560
        %v1563 = vunpack.c.l.b16 %v1515
        %v1564 = vpack.c.b16 %v1563, %v1563
        %1565 = vrot.lane.b32.xlu0 %v1564, 48
        %v1566 = vpop.permute.xlu0 %1565
        %v1568 = vunpack.c.l.b16 %v1480
        %v1569 = vpack.c.b16 %v1568, %v1568
        %1570 = vrot.lane.b32.xlu0 %v1569, 64
        %v1571 = vpop.permute.xlu0 %1570
        %v1573 = vunpack.c.l.b16 %v1514
        %v1574 = vpack.c.b16 %v1573, %v1573
        %1575 = vrot.lane.b32.xlu0 %v1574, 80
        %v1576 = vpop.permute.xlu0 %1575
        %v1578 = vunpack.c.l.b16 %v1482
        %v1579 = vpack.c.b16 %v1578, %v1578
        %1580 = vrot.lane.b32.xlu0 %v1579, 96
        %v1581 = vpop.permute.xlu0 %1580
        %v1583 = vunpack.c.l.b16 %v1516
        %v1584 = vpack.c.b16 %v1583, %v1583
        %1585 = vrot.lane.b32.xlu0 %v1584, 112
        %v1586 = vpop.permute.xlu0 %1585
        %v1589 = vsel %vm655, %v1405, %v1521
        %v1591 = vsel %vm659, %v1589, %v1526
        %v1593 = vsel %vm662, %v1591, %v1531
        %v1595 = vsel %vm665, %v1593, %v1536
        %v1597 = vsel %vm668, %v1595, %v1541
        %v1599 = vsel %vm671, %v1597, %v1546
        %v1601 = vsel %vm674, %v1599, %v1551
        %v1604 = vsel %vm655, %v1473, %v1556
        %v1606 = vsel %vm659, %v1604, %v1561
        %v1608 = vsel %vm662, %v1606, %v1566
        %v1610 = vsel %vm665, %v1608, %v1571
        %v1612 = vsel %vm668, %v1610, %v1576
        %v1614 = vsel %vm671, %v1612, %v1581
        %v1616 = vsel %vm674, %v1614, %v1586
        %v1619 = vunpack.c.l.b16 %v1601
        %v1620 = vunpack.c.l.b16 %v1616
        %v1621 = vpack.c.b16 %v1620, %v1619
        %v1622 = vrot.slane %v1621, 6
        %1624 = vst [vmem:[#allocation3 + $0x8] sm:$0xcc] %v1622
        %1625 = vrot.lane.b32.xlu0 %v1287, 127
        %v1626 = vpop.permute.xlu0 %1625
        %1627 = vrot.lane.b32.xlu0 %v1296, 127
        %v1628 = vpop.permute.xlu0 %1627
        %1629 = vrot.lane.b32.xlu0 %v1307, 127
        %v1630 = vpop.permute.xlu0 %1629
        %1631 = vrot.lane.b32.xlu0 %v1316, 127
        %v1632 = vpop.permute.xlu0 %1631
        %1633 = vrot.lane.b32.xlu0 %v1327, 127
        %v1634 = vpop.permute.xlu0 %1633
        %1635 = vrot.lane.b32.xlu0 %v1336, 127
        %v1636 = vpop.permute.xlu0 %1635
        %1637 = vrot.lane.b32.xlu0 %v1347, 127
        %v1638 = vpop.permute.xlu0 %1637
        %1639 = vrot.lane.b32.xlu0 %v1356, 127
        %v1640 = vpop.permute.xlu0 %1639
        %v1643 = vpack.i.b16 %v1630, %v1626
        %v1644 = vshrl.u32 %v1626, 16
        %v1645 = vshrl.u32 %v1630, 16
        %v1646 = vpack.i.b16 %v1645, %v1644
        %v1649 = vpack.i.b16 %v1638, %v1634
        %v1650 = vshrl.u32 %v1634, 16
        %v1651 = vshrl.u32 %v1638, 16
        %v1652 = vpack.i.b16 %v1651, %v1650
        %v1655 = vpack.i.b16 %v1632, %v1628
        %v1656 = vshrl.u32 %v1628, 16
        %v1657 = vshrl.u32 %v1632, 16
        %v1658 = vpack.i.b16 %v1657, %v1656
        %v1661 = vpack.i.b16 %v1640, %v1636
        %v1662 = vshrl.u32 %v1636, 16
        %v1663 = vshrl.u32 %v1640, 16
        %v1664 = vpack.i.b16 %v1663, %v1662
        %v1667 = vunpack.c.l.s4 1983009808
        %v1668 = vunpack.c.0.s8 %v1667
        %v1669 = vlaneseq
        %v1670 = vshrl.u32 %v1669, 7
        %v1671 = vsub.s32 %v1668, %v1670
        %v1672 = vrot.slane %v1643, %v1671
        %v1675 = vunpack.c.l.s4 1983009808
        %v1676 = vunpack.c.0.s8 %v1675
        %v1677 = vlaneseq
        %v1678 = vshrl.u32 %v1677, 7
        %v1679 = vsub.s32 %v1676, %v1678
        %v1680 = vrot.slane %v1649, %v1679
        %v1681 = vcombine.low %v1672, %v1680
        %v1682 = vcombine.high %v1672, %v1680
        %v1684 = vunpack.c.l.s4 1934713408
        %v1685 = vunpack.c.0.s8 %v1684
        %v1686 = vlaneseq
        %v1687 = vshrl.u32 %v1686, 7
        %v1688 = vsub.s32 %v1685, %v1687
        %v1689 = vrot.slane %v1681, %v1688
        %v1691 = vunpack.c.l.s4 1934713408
        %v1692 = vunpack.c.0.s8 %v1691
        %v1693 = vlaneseq
        %v1694 = vshrl.u32 %v1693, 7
        %v1695 = vsub.s32 %v1692, %v1694
        %v1696 = vrot.slane %v1682, %v1695
        %v1697 = vcombine.high %v1689, 0
        %v1698 = vcombine.high %v1696, 0
        %v1701 = vunpack.c.l.s4 1983009808
        %v1702 = vunpack.c.0.s8 %v1701
        %v1703 = vlaneseq
        %v1704 = vshrl.u32 %v1703, 7
        %v1705 = vsub.s32 %v1702, %v1704
        %v1706 = vrot.slane %v1646, %v1705
        %v1709 = vunpack.c.l.s4 1983009808
        %v1710 = vunpack.c.0.s8 %v1709
        %v1711 = vlaneseq
        %v1712 = vshrl.u32 %v1711, 7
        %v1713 = vsub.s32 %v1710, %v1712
        %v1714 = vrot.slane %v1652, %v1713
        %v1715 = vcombine.low %v1706, %v1714
        %v1716 = vcombine.high %v1706, %v1714
        %v1718 = vunpack.c.l.s4 1934713408
        %v1719 = vunpack.c.0.s8 %v1718
        %v1720 = vlaneseq
        %v1721 = vshrl.u32 %v1720, 7
        %v1722 = vsub.s32 %v1719, %v1721
        %v1723 = vrot.slane %v1715, %v1722
        %v1725 = vunpack.c.l.s4 1934713408
        %v1726 = vunpack.c.0.s8 %v1725
        %v1727 = vlaneseq
        %v1728 = vshrl.u32 %v1727, 7
        %v1729 = vsub.s32 %v1726, %v1728
        %v1730 = vrot.slane %v1716, %v1729
        %v1731 = vcombine.high %v1723, 0
        %v1732 = vcombine.high %v1730, 0
        %v1735 = vunpack.c.l.s4 1983009808
        %v1736 = vunpack.c.0.s8 %v1735
        %v1737 = vlaneseq
        %v1738 = vshrl.u32 %v1737, 7
        %v1739 = vsub.s32 %v1736, %v1738
        %v1740 = vrot.slane %v1655, %v1739
        %v1743 = vunpack.c.l.s4 1983009808
        %v1744 = vunpack.c.0.s8 %v1743
        %v1745 = vlaneseq
        %v1746 = vshrl.u32 %v1745, 7
        %v1747 = vsub.s32 %v1744, %v1746
        %v1748 = vrot.slane %v1661, %v1747
        %v1749 = vcombine.low %v1740, %v1748
        %v1750 = vcombine.high %v1740, %v1748
        %v1752 = vunpack.c.l.s4 1934713408
        %v1753 = vunpack.c.0.s8 %v1752
        %v1754 = vlaneseq
        %v1755 = vshrl.u32 %v1754, 7
        %v1756 = vsub.s32 %v1753, %v1755
        %v1757 = vrot.slane %v1749, %v1756
        %v1759 = vunpack.c.l.s4 1934713408
        %v1760 = vunpack.c.0.s8 %v1759
        %v1761 = vlaneseq
        %v1762 = vshrl.u32 %v1761, 7
        %v1763 = vsub.s32 %v1760, %v1762
        %v1764 = vrot.slane %v1750, %v1763
        %v1765 = vcombine.high %v1757, 0
        %v1766 = vcombine.high %v1764, 0
        %v1769 = vunpack.c.l.s4 1983009808
        %v1770 = vunpack.c.0.s8 %v1769
        %v1771 = vlaneseq
        %v1772 = vshrl.u32 %v1771, 7
        %v1773 = vsub.s32 %v1770, %v1772
        %v1774 = vrot.slane %v1658, %v1773
        %v1777 = vunpack.c.l.s4 1983009808
        %v1778 = vunpack.c.0.s8 %v1777
        %v1779 = vlaneseq
        %v1780 = vshrl.u32 %v1779, 7
        %v1781 = vsub.s32 %v1778, %v1780
        %v1782 = vrot.slane %v1664, %v1781
        %v1783 = vcombine.low %v1774, %v1782
        %v1784 = vcombine.high %v1774, %v1782
        %v1786 = vunpack.c.l.s4 1934713408
        %v1787 = vunpack.c.0.s8 %v1786
        %v1788 = vlaneseq
        %v1789 = vshrl.u32 %v1788, 7
        %v1790 = vsub.s32 %v1787, %v1789
        %v1791 = vrot.slane %v1783, %v1790
        %v1793 = vunpack.c.l.s4 1934713408
        %v1794 = vunpack.c.0.s8 %v1793
        %v1795 = vlaneseq
        %v1796 = vshrl.u32 %v1795, 7
        %v1797 = vsub.s32 %v1794, %v1796
        %v1798 = vrot.slane %v1784, %v1797
        %v1799 = vcombine.high %v1791, 0
        %v1800 = vcombine.high %v1798, 0
        %v1802 = vunpack.c.l.b16 %v1723
        %v1803 = vpack.c.b16 %v1802, %v1802
        %1804 = vrot.lane.b32.xlu0 %v1803, 16
        %v1805 = vpop.permute.xlu0 %1804
        %v1807 = vunpack.c.l.b16 %v1697
        %v1808 = vpack.c.b16 %v1807, %v1807
        %1809 = vrot.lane.b32.xlu0 %v1808, 32
        %v1810 = vpop.permute.xlu0 %1809
        %v1812 = vunpack.c.l.b16 %v1731
        %v1813 = vpack.c.b16 %v1812, %v1812
        %1814 = vrot.lane.b32.xlu0 %v1813, 48
        %v1815 = vpop.permute.xlu0 %1814
        %v1817 = vunpack.c.l.b16 %v1696
        %v1818 = vpack.c.b16 %v1817, %v1817
        %1819 = vrot.lane.b32.xlu0 %v1818, 64
        %v1820 = vpop.permute.xlu0 %1819
        %v1822 = vunpack.c.l.b16 %v1730
        %v1823 = vpack.c.b16 %v1822, %v1822
        %1824 = vrot.lane.b32.xlu0 %v1823, 80
        %v1825 = vpop.permute.xlu0 %1824
        %v1827 = vunpack.c.l.b16 %v1698
        %v1828 = vpack.c.b16 %v1827, %v1827
        %1829 = vrot.lane.b32.xlu0 %v1828, 96
        %v1830 = vpop.permute.xlu0 %1829
        %v1832 = vunpack.c.l.b16 %v1732
        %v1833 = vpack.c.b16 %v1832, %v1832
        %1834 = vrot.lane.b32.xlu0 %v1833, 112
        %v1835 = vpop.permute.xlu0 %1834
        %v1837 = vunpack.c.l.b16 %v1791
        %v1838 = vpack.c.b16 %v1837, %v1837
        %1839 = vrot.lane.b32.xlu0 %v1838, 16
        %v1840 = vpop.permute.xlu0 %1839
        %v1842 = vunpack.c.l.b16 %v1765
        %v1843 = vpack.c.b16 %v1842, %v1842
        %1844 = vrot.lane.b32.xlu0 %v1843, 32
        %v1845 = vpop.permute.xlu0 %1844
        %v1847 = vunpack.c.l.b16 %v1799
        %v1848 = vpack.c.b16 %v1847, %v1847
        %1849 = vrot.lane.b32.xlu0 %v1848, 48
        %v1850 = vpop.permute.xlu0 %1849
        %v1852 = vunpack.c.l.b16 %v1764
        %v1853 = vpack.c.b16 %v1852, %v1852
        %1854 = vrot.lane.b32.xlu0 %v1853, 64
        %v1855 = vpop.permute.xlu0 %1854
        %v1857 = vunpack.c.l.b16 %v1798
        %v1858 = vpack.c.b16 %v1857, %v1857
        %1859 = vrot.lane.b32.xlu0 %v1858, 80
        %v1860 = vpop.permute.xlu0 %1859
        %v1862 = vunpack.c.l.b16 %v1766
        %v1863 = vpack.c.b16 %v1862, %v1862
        %1864 = vrot.lane.b32.xlu0 %v1863, 96
        %v1865 = vpop.permute.xlu0 %1864
        %v1867 = vunpack.c.l.b16 %v1800
        %v1868 = vpack.c.b16 %v1867, %v1867
        %1869 = vrot.lane.b32.xlu0 %v1868, 112
        %v1870 = vpop.permute.xlu0 %1869
        %v1873 = vsel %vm655, %v1689, %v1805
        %v1875 = vsel %vm659, %v1873, %v1810
        %v1877 = vsel %vm662, %v1875, %v1815
        %v1879 = vsel %vm665, %v1877, %v1820
        %v1881 = vsel %vm668, %v1879, %v1825
        %v1883 = vsel %vm671, %v1881, %v1830
        %v1885 = vsel %vm674, %v1883, %v1835
        %v1888 = vsel %vm655, %v1757, %v1840
        %v1890 = vsel %vm659, %v1888, %v1845
        %v1892 = vsel %vm662, %v1890, %v1850
        %v1894 = vsel %vm665, %v1892, %v1855
        %v1896 = vsel %vm668, %v1894, %v1860
        %v1898 = vsel %vm671, %v1896, %v1865
        %v1900 = vsel %vm674, %v1898, %v1870
        %v1903 = vunpack.c.l.b16 %v1885
        %v1904 = vunpack.c.l.b16 %v1900
        %v1905 = vpack.c.b16 %v1904, %v1903
        %1907 = vst [vmem:[#allocation3 + $0x10] sm:$0x33] %v1905
        %1908 = vrot.lane.b32.xlu0 %v1287, 126
        %v1909 = vpop.permute.xlu0 %1908
        %1910 = vrot.lane.b32.xlu0 %v1296, 126
        %v1911 = vpop.permute.xlu0 %1910
        %1912 = vrot.lane.b32.xlu0 %v1307, 126
        %v1913 = vpop.permute.xlu0 %1912
        %1914 = vrot.lane.b32.xlu0 %v1316, 126
        %v1915 = vpop.permute.xlu0 %1914
        %1916 = vrot.lane.b32.xlu0 %v1327, 126
        %v1917 = vpop.permute.xlu0 %1916
        %1918 = vrot.lane.b32.xlu0 %v1336, 126
        %v1919 = vpop.permute.xlu0 %1918
        %1920 = vrot.lane.b32.xlu0 %v1347, 126
        %v1921 = vpop.permute.xlu0 %1920
        %1922 = vrot.lane.b32.xlu0 %v1356, 126
        %v1923 = vpop.permute.xlu0 %1922
        %v1926 = vpack.i.b16 %v1913, %v1909
        %v1927 = vshrl.u32 %v1909, 16
        %v1928 = vshrl.u32 %v1913, 16
        %v1929 = vpack.i.b16 %v1928, %v1927
        %v1932 = vpack.i.b16 %v1921, %v1917
        %v1933 = vshrl.u32 %v1917, 16
        %v1934 = vshrl.u32 %v1921, 16
        %v1935 = vpack.i.b16 %v1934, %v1933
        %v1938 = vpack.i.b16 %v1915, %v1911
        %v1939 = vshrl.u32 %v1911, 16
        %v1940 = vshrl.u32 %v1915, 16
        %v1941 = vpack.i.b16 %v1940, %v1939
        %v1944 = vpack.i.b16 %v1923, %v1919
        %v1945 = vshrl.u32 %v1919, 16
        %v1946 = vshrl.u32 %v1923, 16
        %v1947 = vpack.i.b16 %v1946, %v1945
        %v1950 = vunpack.c.l.s4 1983009808
        %v1951 = vunpack.c.0.s8 %v1950
        %v1952 = vlaneseq
        %v1953 = vshrl.u32 %v1952, 7
        %v1954 = vsub.s32 %v1951, %v1953
        %v1955 = vrot.slane %v1926, %v1954
        %v1958 = vunpack.c.l.s4 1983009808
        %v1959 = vunpack.c.0.s8 %v1958
        %v1960 = vlaneseq
        %v1961 = vshrl.u32 %v1960, 7
        %v1962 = vsub.s32 %v1959, %v1961
        %v1963 = vrot.slane %v1932, %v1962
        %v1964 = vcombine.low %v1955, %v1963
        %v1965 = vcombine.high %v1955, %v1963
        %v1967 = vunpack.c.l.s4 1934713408
        %v1968 = vunpack.c.0.s8 %v1967
        %v1969 = vlaneseq
        %v1970 = vshrl.u32 %v1969, 7
        %v1971 = vsub.s32 %v1968, %v1970
        %v1972 = vrot.slane %v1964, %v1971
        %v1974 = vunpack.c.l.s4 1934713408
        %v1975 = vunpack.c.0.s8 %v1974
        %v1976 = vlaneseq
        %v1977 = vshrl.u32 %v1976, 7
        %v1978 = vsub.s32 %v1975, %v1977
        %v1979 = vrot.slane %v1965, %v1978
        %v1980 = vcombine.high %v1972, 0
        %v1981 = vcombine.high %v1979, 0
        %v1984 = vunpack.c.l.s4 1983009808
        %v1985 = vunpack.c.0.s8 %v1984
        %v1986 = vlaneseq
        %v1987 = vshrl.u32 %v1986, 7
        %v1988 = vsub.s32 %v1985, %v1987
        %v1989 = vrot.slane %v1929, %v1988
        %v1992 = vunpack.c.l.s4 1983009808
        %v1993 = vunpack.c.0.s8 %v1992
        %v1994 = vlaneseq
        %v1995 = vshrl.u32 %v1994, 7
        %v1996 = vsub.s32 %v1993, %v1995
        %v1997 = vrot.slane %v1935, %v1996
        %v1998 = vcombine.low %v1989, %v1997
        %v1999 = vcombine.high %v1989, %v1997
        %v2001 = vunpack.c.l.s4 1934713408
        %v2002 = vunpack.c.0.s8 %v2001
        %v2003 = vlaneseq
        %v2004 = vshrl.u32 %v2003, 7
        %v2005 = vsub.s32 %v2002, %v2004
        %v2006 = vrot.slane %v1998, %v2005
        %v2008 = vunpack.c.l.s4 1934713408
        %v2009 = vunpack.c.0.s8 %v2008
        %v2010 = vlaneseq
        %v2011 = vshrl.u32 %v2010, 7
        %v2012 = vsub.s32 %v2009, %v2011
        %v2013 = vrot.slane %v1999, %v2012
        %v2014 = vcombine.high %v2006, 0
        %v2015 = vcombine.high %v2013, 0
        %v2018 = vunpack.c.l.s4 1983009808
        %v2019 = vunpack.c.0.s8 %v2018
        %v2020 = vlaneseq
        %v2021 = vshrl.u32 %v2020, 7
        %v2022 = vsub.s32 %v2019, %v2021
        %v2023 = vrot.slane %v1938, %v2022
        %v2026 = vunpack.c.l.s4 1983009808
        %v2027 = vunpack.c.0.s8 %v2026
        %v2028 = vlaneseq
        %v2029 = vshrl.u32 %v2028, 7
        %v2030 = vsub.s32 %v2027, %v2029
        %v2031 = vrot.slane %v1944, %v2030
        %v2032 = vcombine.low %v2023, %v2031
        %v2033 = vcombine.high %v2023, %v2031
        %v2035 = vunpack.c.l.s4 1934713408
        %v2036 = vunpack.c.0.s8 %v2035
        %v2037 = vlaneseq
        %v2038 = vshrl.u32 %v2037, 7
        %v2039 = vsub.s32 %v2036, %v2038
        %v2040 = vrot.slane %v2032, %v2039
        %v2042 = vunpack.c.l.s4 1934713408
        %v2043 = vunpack.c.0.s8 %v2042
        %v2044 = vlaneseq
        %v2045 = vshrl.u32 %v2044, 7
        %v2046 = vsub.s32 %v2043, %v2045
        %v2047 = vrot.slane %v2033, %v2046
        %v2048 = vcombine.high %v2040, 0
        %v2049 = vcombine.high %v2047, 0
        %v2052 = vunpack.c.l.s4 1983009808
        %v2053 = vunpack.c.0.s8 %v2052
        %v2054 = vlaneseq
        %v2055 = vshrl.u32 %v2054, 7
        %v2056 = vsub.s32 %v2053, %v2055
        %v2057 = vrot.slane %v1941, %v2056
        %v2060 = vunpack.c.l.s4 1983009808
        %v2061 = vunpack.c.0.s8 %v2060
        %v2062 = vlaneseq
        %v2063 = vshrl.u32 %v2062, 7
        %v2064 = vsub.s32 %v2061, %v2063
        %v2065 = vrot.slane %v1947, %v2064
        %v2066 = vcombine.low %v2057, %v2065
        %v2067 = vcombine.high %v2057, %v2065
        %v2069 = vunpack.c.l.s4 1934713408
        %v2070 = vunpack.c.0.s8 %v2069
        %v2071 = vlaneseq
        %v2072 = vshrl.u32 %v2071, 7
        %v2073 = vsub.s32 %v2070, %v2072
        %v2074 = vrot.slane %v2066, %v2073
        %v2076 = vunpack.c.l.s4 1934713408
        %v2077 = vunpack.c.0.s8 %v2076
        %v2078 = vlaneseq
        %v2079 = vshrl.u32 %v2078, 7
        %v2080 = vsub.s32 %v2077, %v2079
        %v2081 = vrot.slane %v2067, %v2080
        %v2082 = vcombine.high %v2074, 0
        %v2083 = vcombine.high %v2081, 0
        %v2085 = vunpack.c.l.b16 %v2006
        %v2086 = vpack.c.b16 %v2085, %v2085
        %2087 = vrot.lane.b32.xlu0 %v2086, 16
        %v2088 = vpop.permute.xlu0 %2087
        %v2090 = vunpack.c.l.b16 %v1980
        %v2091 = vpack.c.b16 %v2090, %v2090
        %2092 = vrot.lane.b32.xlu0 %v2091, 32
        %v2093 = vpop.permute.xlu0 %2092
        %v2095 = vunpack.c.l.b16 %v2014
        %v2096 = vpack.c.b16 %v2095, %v2095
        %2097 = vrot.lane.b32.xlu0 %v2096, 48
        %v2098 = vpop.permute.xlu0 %2097
        %v2100 = vunpack.c.l.b16 %v1979
        %v2101 = vpack.c.b16 %v2100, %v2100
        %2102 = vrot.lane.b32.xlu0 %v2101, 64
        %v2103 = vpop.permute.xlu0 %2102
        %v2105 = vunpack.c.l.b16 %v2013
        %v2106 = vpack.c.b16 %v2105, %v2105
        %2107 = vrot.lane.b32.xlu0 %v2106, 80
        %v2108 = vpop.permute.xlu0 %2107
        %v2110 = vunpack.c.l.b16 %v1981
        %v2111 = vpack.c.b16 %v2110, %v2110
        %2112 = vrot.lane.b32.xlu0 %v2111, 96
        %v2113 = vpop.permute.xlu0 %2112
        %v2115 = vunpack.c.l.b16 %v2015
        %v2116 = vpack.c.b16 %v2115, %v2115
        %2117 = vrot.lane.b32.xlu0 %v2116, 112
        %v2118 = vpop.permute.xlu0 %2117
        %v2120 = vunpack.c.l.b16 %v2074
        %v2121 = vpack.c.b16 %v2120, %v2120
        %2122 = vrot.lane.b32.xlu0 %v2121, 16
        %v2123 = vpop.permute.xlu0 %2122
        %v2125 = vunpack.c.l.b16 %v2048
        %v2126 = vpack.c.b16 %v2125, %v2125
        %2127 = vrot.lane.b32.xlu0 %v2126, 32
        %v2128 = vpop.permute.xlu0 %2127
        %v2130 = vunpack.c.l.b16 %v2082
        %v2131 = vpack.c.b16 %v2130, %v2130
        %2132 = vrot.lane.b32.xlu0 %v2131, 48
        %v2133 = vpop.permute.xlu0 %2132
        %v2135 = vunpack.c.l.b16 %v2047
        %v2136 = vpack.c.b16 %v2135, %v2135
        %2137 = vrot.lane.b32.xlu0 %v2136, 64
        %v2138 = vpop.permute.xlu0 %2137
        %v2140 = vunpack.c.l.b16 %v2081
        %v2141 = vpack.c.b16 %v2140, %v2140
        %2142 = vrot.lane.b32.xlu0 %v2141, 80
        %v2143 = vpop.permute.xlu0 %2142
        %v2145 = vunpack.c.l.b16 %v2049
        %v2146 = vpack.c.b16 %v2145, %v2145
        %2147 = vrot.lane.b32.xlu0 %v2146, 96
        %v2148 = vpop.permute.xlu0 %2147
        %v2150 = vunpack.c.l.b16 %v2083
        %v2151 = vpack.c.b16 %v2150, %v2150
        %2152 = vrot.lane.b32.xlu0 %v2151, 112
        %v2153 = vpop.permute.xlu0 %2152
        %v2156 = vsel %vm655, %v1972, %v2088
        %v2158 = vsel %vm659, %v2156, %v2093
        %v2160 = vsel %vm662, %v2158, %v2098
        %v2162 = vsel %vm665, %v2160, %v2103
        %v2164 = vsel %vm668, %v2162, %v2108
        %v2166 = vsel %vm671, %v2164, %v2113
        %v2168 = vsel %vm674, %v2166, %v2118
        %v2171 = vsel %vm655, %v2040, %v2123
        %v2173 = vsel %vm659, %v2171, %v2128
        %v2175 = vsel %vm662, %v2173, %v2133
        %v2177 = vsel %vm665, %v2175, %v2138
        %v2179 = vsel %vm668, %v2177, %v2143
        %v2181 = vsel %vm671, %v2179, %v2148
        %v2183 = vsel %vm674, %v2181, %v2153
        %v2186 = vunpack.c.l.b16 %v2168
        %v2187 = vunpack.c.l.b16 %v2183
        %v2188 = vpack.c.b16 %v2187, %v2186
        %v2189 = vrot.slane %v2188, 6
        %2191 = vst [vmem:[#allocation3 + $0x10] sm:$0xcc] %v2189
        %vm2196 = vcmask 1042432
        %vm2197 = vcmask 1046532
        %vm2198 = vmor %vm2196, %vm2197
        %v2199 = vrot.slane %v413, 5
        %v2200 = vrot.slane %v2199, 4
        %v2201 = vrot.slane %v414, 5
        %v2202 = vsel %vm2198, %v2200, %v2201
        %v2203 = vrot.slane %v2201, 4
        %v2204 = vrot.slane %v415, 5
        %v2205 = vsel %vm2198, %v2203, %v2204
        %v2206 = vrot.slane %v416, 5
        %v2207 = vrot.slane %v2206, 4
        %v2208 = vrot.slane %v417, 5
        %v2209 = vsel %vm2198, %v2207, %v2208
        %v2210 = vrot.slane %v2208, 4
        %v2211 = vrot.slane %v418, 5
        %v2212 = vsel %vm2198, %v2210, %v2211
        %v2213 = vrot.slane %v419, 5
        %v2214 = vrot.slane %v2213, 4
        %v2215 = vrot.slane %v420, 5
        %v2216 = vsel %vm2198, %v2214, %v2215
        %v2217 = vrot.slane %v2215, 4
        %v2218 = vrot.slane %v421, 5
        %v2219 = vsel %vm2198, %v2217, %v2218
        %v2220 = vrot.slane %v422, 5
        %v2221 = vrot.slane %v2220, 4
        %v2222 = vrot.slane %v423, 5
        %v2223 = vsel %vm2198, %v2221, %v2222
        %v2224 = vrot.slane %v2222, 4
        %v2225 = vrot.slane %v424, 5
        %v2226 = vsel %vm2198, %v2224, %v2225
        %v2229 = vpack.i.b16 %v2209, %v2202
        %v2230 = vshrl.u32 %v2202, 16
        %v2231 = vshrl.u32 %v2209, 16
        %v2232 = vpack.i.b16 %v2231, %v2230
        %v2235 = vpack.i.b16 %v2223, %v2216
        %v2236 = vshrl.u32 %v2216, 16
        %v2237 = vshrl.u32 %v2223, 16
        %v2238 = vpack.i.b16 %v2237, %v2236
        %v2241 = vpack.i.b16 %v2212, %v2205
        %v2242 = vshrl.u32 %v2205, 16
        %v2243 = vshrl.u32 %v2212, 16
        %v2244 = vpack.i.b16 %v2243, %v2242
        %v2247 = vpack.i.b16 %v2226, %v2219
        %v2248 = vshrl.u32 %v2219, 16
        %v2249 = vshrl.u32 %v2226, 16
        %v2250 = vpack.i.b16 %v2249, %v2248
        %v2253 = vunpack.c.l.s4 1983009808
        %v2254 = vunpack.c.0.s8 %v2253
        %v2255 = vlaneseq
        %v2256 = vshrl.u32 %v2255, 7
        %v2257 = vsub.s32 %v2254, %v2256
        %v2258 = vrot.slane %v2229, %v2257
        %v2261 = vunpack.c.l.s4 1983009808
        %v2262 = vunpack.c.0.s8 %v2261
        %v2263 = vlaneseq
        %v2264 = vshrl.u32 %v2263, 7
        %v2265 = vsub.s32 %v2262, %v2264
        %v2266 = vrot.slane %v2235, %v2265
        %v2267 = vcombine.low %v2258, %v2266
        %v2268 = vcombine.high %v2258, %v2266
        %v2270 = vunpack.c.l.s4 1934713408
        %v2271 = vunpack.c.0.s8 %v2270
        %v2272 = vlaneseq
        %v2273 = vshrl.u32 %v2272, 7
        %v2274 = vsub.s32 %v2271, %v2273
        %v2275 = vrot.slane %v2267, %v2274
        %v2277 = vunpack.c.l.s4 1934713408
        %v2278 = vunpack.c.0.s8 %v2277
        %v2279 = vlaneseq
        %v2280 = vshrl.u32 %v2279, 7
        %v2281 = vsub.s32 %v2278, %v2280
        %v2282 = vrot.slane %v2268, %v2281
        %v2283 = vcombine.high %v2275, 0
        %v2284 = vcombine.high %v2282, 0
        %v2287 = vunpack.c.l.s4 1983009808
        %v2288 = vunpack.c.0.s8 %v2287
        %v2289 = vlaneseq
        %v2290 = vshrl.u32 %v2289, 7
        %v2291 = vsub.s32 %v2288, %v2290
        %v2292 = vrot.slane %v2232, %v2291
        %v2295 = vunpack.c.l.s4 1983009808
        %v2296 = vunpack.c.0.s8 %v2295
        %v2297 = vlaneseq
        %v2298 = vshrl.u32 %v2297, 7
        %v2299 = vsub.s32 %v2296, %v2298
        %v2300 = vrot.slane %v2238, %v2299
        %v2301 = vcombine.low %v2292, %v2300
        %v2302 = vcombine.high %v2292, %v2300
        %v2304 = vunpack.c.l.s4 1934713408
        %v2305 = vunpack.c.0.s8 %v2304
        %v2306 = vlaneseq
        %v2307 = vshrl.u32 %v2306, 7
        %v2308 = vsub.s32 %v2305, %v2307
        %v2309 = vrot.slane %v2301, %v2308
        %v2311 = vunpack.c.l.s4 1934713408
        %v2312 = vunpack.c.0.s8 %v2311
        %v2313 = vlaneseq
        %v2314 = vshrl.u32 %v2313, 7
        %v2315 = vsub.s32 %v2312, %v2314
        %v2316 = vrot.slane %v2302, %v2315
        %v2317 = vcombine.high %v2309, 0
        %v2318 = vcombine.high %v2316, 0
        %v2321 = vunpack.c.l.s4 1983009808
        %v2322 = vunpack.c.0.s8 %v2321
        %v2323 = vlaneseq
        %v2324 = vshrl.u32 %v2323, 7
        %v2325 = vsub.s32 %v2322, %v2324
        %v2326 = vrot.slane %v2241, %v2325
        %v2329 = vunpack.c.l.s4 1983009808
        %v2330 = vunpack.c.0.s8 %v2329
        %v2331 = vlaneseq
        %v2332 = vshrl.u32 %v2331, 7
        %v2333 = vsub.s32 %v2330, %v2332
        %v2334 = vrot.slane %v2247, %v2333
        %v2335 = vcombine.low %v2326, %v2334
        %v2336 = vcombine.high %v2326, %v2334
        %v2338 = vunpack.c.l.s4 1934713408
        %v2339 = vunpack.c.0.s8 %v2338
        %v2340 = vlaneseq
        %v2341 = vshrl.u32 %v2340, 7
        %v2342 = vsub.s32 %v2339, %v2341
        %v2343 = vrot.slane %v2335, %v2342
        %v2345 = vunpack.c.l.s4 1934713408
        %v2346 = vunpack.c.0.s8 %v2345
        %v2347 = vlaneseq
        %v2348 = vshrl.u32 %v2347, 7
        %v2349 = vsub.s32 %v2346, %v2348
        %v2350 = vrot.slane %v2336, %v2349
        %v2351 = vcombine.high %v2343, 0
        %v2352 = vcombine.high %v2350, 0
        %v2355 = vunpack.c.l.s4 1983009808
        %v2356 = vunpack.c.0.s8 %v2355
        %v2357 = vlaneseq
        %v2358 = vshrl.u32 %v2357, 7
        %v2359 = vsub.s32 %v2356, %v2358
        %v2360 = vrot.slane %v2244, %v2359
        %v2363 = vunpack.c.l.s4 1983009808
        %v2364 = vunpack.c.0.s8 %v2363
        %v2365 = vlaneseq
        %v2366 = vshrl.u32 %v2365, 7
        %v2367 = vsub.s32 %v2364, %v2366
        %v2368 = vrot.slane %v2250, %v2367
        %v2369 = vcombine.low %v2360, %v2368
        %v2370 = vcombine.high %v2360, %v2368
        %v2372 = vunpack.c.l.s4 1934713408
        %v2373 = vunpack.c.0.s8 %v2372
        %v2374 = vlaneseq
        %v2375 = vshrl.u32 %v2374, 7
        %v2376 = vsub.s32 %v2373, %v2375
        %v2377 = vrot.slane %v2369, %v2376
        %v2379 = vunpack.c.l.s4 1934713408
        %v2380 = vunpack.c.0.s8 %v2379
        %v2381 = vlaneseq
        %v2382 = vshrl.u32 %v2381, 7
        %v2383 = vsub.s32 %v2380, %v2382
        %v2384 = vrot.slane %v2370, %v2383
        %v2385 = vcombine.high %v2377, 0
        %v2386 = vcombine.high %v2384, 0
        %v2388 = vunpack.c.l.b16 %v2309
        %v2389 = vpack.c.b16 %v2388, %v2388
        %2390 = vrot.lane.b32.xlu0 %v2389, 16
        %v2391 = vpop.permute.xlu0 %2390
        %v2393 = vunpack.c.l.b16 %v2283
        %v2394 = vpack.c.b16 %v2393, %v2393
        %2395 = vrot.lane.b32.xlu0 %v2394, 32
        %v2396 = vpop.permute.xlu0 %2395
        %v2398 = vunpack.c.l.b16 %v2317
        %v2399 = vpack.c.b16 %v2398, %v2398
        %2400 = vrot.lane.b32.xlu0 %v2399, 48
        %v2401 = vpop.permute.xlu0 %2400
        %v2403 = vunpack.c.l.b16 %v2282
        %v2404 = vpack.c.b16 %v2403, %v2403
        %2405 = vrot.lane.b32.xlu0 %v2404, 64
        %v2406 = vpop.permute.xlu0 %2405
        %v2408 = vunpack.c.l.b16 %v2316
        %v2409 = vpack.c.b16 %v2408, %v2408
        %2410 = vrot.lane.b32.xlu0 %v2409, 80
        %v2411 = vpop.permute.xlu0 %2410
        %v2413 = vunpack.c.l.b16 %v2284
        %v2414 = vpack.c.b16 %v2413, %v2413
        %2415 = vrot.lane.b32.xlu0 %v2414, 96
        %v2416 = vpop.permute.xlu0 %2415
        %v2418 = vunpack.c.l.b16 %v2318
        %v2419 = vpack.c.b16 %v2418, %v2418
        %2420 = vrot.lane.b32.xlu0 %v2419, 112
        %v2421 = vpop.permute.xlu0 %2420
        %v2423 = vunpack.c.l.b16 %v2377
        %v2424 = vpack.c.b16 %v2423, %v2423
        %2425 = vrot.lane.b32.xlu0 %v2424, 16
        %v2426 = vpop.permute.xlu0 %2425
        %v2428 = vunpack.c.l.b16 %v2351
        %v2429 = vpack.c.b16 %v2428, %v2428
        %2430 = vrot.lane.b32.xlu0 %v2429, 32
        %v2431 = vpop.permute.xlu0 %2430
        %v2433 = vunpack.c.l.b16 %v2385
        %v2434 = vpack.c.b16 %v2433, %v2433
        %2435 = vrot.lane.b32.xlu0 %v2434, 48
        %v2436 = vpop.permute.xlu0 %2435
        %v2438 = vunpack.c.l.b16 %v2350
        %v2439 = vpack.c.b16 %v2438, %v2438
        %2440 = vrot.lane.b32.xlu0 %v2439, 64
        %v2441 = vpop.permute.xlu0 %2440
        %v2443 = vunpack.c.l.b16 %v2384
        %v2444 = vpack.c.b16 %v2443, %v2443
        %2445 = vrot.lane.b32.xlu0 %v2444, 80
        %v2446 = vpop.permute.xlu0 %2445
        %v2448 = vunpack.c.l.b16 %v2352
        %v2449 = vpack.c.b16 %v2448, %v2448
        %2450 = vrot.lane.b32.xlu0 %v2449, 96
        %v2451 = vpop.permute.xlu0 %2450
        %v2453 = vunpack.c.l.b16 %v2386
        %v2454 = vpack.c.b16 %v2453, %v2453
        %2455 = vrot.lane.b32.xlu0 %v2454, 112
        %v2456 = vpop.permute.xlu0 %2455
        %v2459 = vsel %vm655, %v2275, %v2391
        %v2461 = vsel %vm659, %v2459, %v2396
        %v2463 = vsel %vm662, %v2461, %v2401
        %v2465 = vsel %vm665, %v2463, %v2406
        %v2467 = vsel %vm668, %v2465, %v2411
        %v2469 = vsel %vm671, %v2467, %v2416
        %v2471 = vsel %vm674, %v2469, %v2421
        %v2474 = vsel %vm655, %v2343, %v2426
        %v2476 = vsel %vm659, %v2474, %v2431
        %v2478 = vsel %vm662, %v2476, %v2436
        %v2480 = vsel %vm665, %v2478, %v2441
        %v2482 = vsel %vm668, %v2480, %v2446
        %v2484 = vsel %vm671, %v2482, %v2451
        %v2486 = vsel %vm674, %v2484, %v2456
        %v2489 = vunpack.c.l.b16 %v2471
        %v2490 = vunpack.c.l.b16 %v2486
        %v2491 = vpack.c.b16 %v2490, %v2489
        %2493 = vst [vmem:[#allocation3 + $0x18] sm:$0x33] %v2491
        %2494 = vrot.lane.b32.xlu0 %v2202, 127
        %v2495 = vpop.permute.xlu0 %2494
        %2496 = vrot.lane.b32.xlu0 %v2205, 127
        %v2497 = vpop.permute.xlu0 %2496
        %2498 = vrot.lane.b32.xlu0 %v2209, 127
        %v2499 = vpop.permute.xlu0 %2498
        %2500 = vrot.lane.b32.xlu0 %v2212, 127
        %v2501 = vpop.permute.xlu0 %2500
        %2502 = vrot.lane.b32.xlu0 %v2216, 127
        %v2503 = vpop.permute.xlu0 %2502
        %2504 = vrot.lane.b32.xlu0 %v2219, 127
        %v2505 = vpop.permute.xlu0 %2504
        %2506 = vrot.lane.b32.xlu0 %v2223, 127
        %v2507 = vpop.permute.xlu0 %2506
        %2508 = vrot.lane.b32.xlu0 %v2226, 127
        %v2509 = vpop.permute.xlu0 %2508
        %v2512 = vpack.i.b16 %v2499, %v2495
        %v2513 = vshrl.u32 %v2495, 16
        %v2514 = vshrl.u32 %v2499, 16
        %v2515 = vpack.i.b16 %v2514, %v2513
        %v2518 = vpack.i.b16 %v2507, %v2503
        %v2519 = vshrl.u32 %v2503, 16
        %v2520 = vshrl.u32 %v2507, 16
        %v2521 = vpack.i.b16 %v2520, %v2519
        %v2524 = vpack.i.b16 %v2501, %v2497
        %v2525 = vshrl.u32 %v2497, 16
        %v2526 = vshrl.u32 %v2501, 16
        %v2527 = vpack.i.b16 %v2526, %v2525
        %v2530 = vpack.i.b16 %v2509, %v2505
        %v2531 = vshrl.u32 %v2505, 16
        %v2532 = vshrl.u32 %v2509, 16
        %v2533 = vpack.i.b16 %v2532, %v2531
        %v2536 = vunpack.c.l.s4 1983009808
        %v2537 = vunpack.c.0.s8 %v2536
        %v2538 = vlaneseq
        %v2539 = vshrl.u32 %v2538, 7
        %v2540 = vsub.s32 %v2537, %v2539
        %v2541 = vrot.slane %v2512, %v2540
        %v2544 = vunpack.c.l.s4 1983009808
        %v2545 = vunpack.c.0.s8 %v2544
        %v2546 = vlaneseq
        %v2547 = vshrl.u32 %v2546, 7
        %v2548 = vsub.s32 %v2545, %v2547
        %v2549 = vrot.slane %v2518, %v2548
        %v2550 = vcombine.low %v2541, %v2549
        %v2551 = vcombine.high %v2541, %v2549
        %v2553 = vunpack.c.l.s4 1934713408
        %v2554 = vunpack.c.0.s8 %v2553
        %v2555 = vlaneseq
        %v2556 = vshrl.u32 %v2555, 7
        %v2557 = vsub.s32 %v2554, %v2556
        %v2558 = vrot.slane %v2550, %v2557
        %v2560 = vunpack.c.l.s4 1934713408
        %v2561 = vunpack.c.0.s8 %v2560
        %v2562 = vlaneseq
        %v2563 = vshrl.u32 %v2562, 7
        %v2564 = vsub.s32 %v2561, %v2563
        %v2565 = vrot.slane %v2551, %v2564
        %v2566 = vcombine.high %v2558, 0
        %v2567 = vcombine.high %v2565, 0
        %v2570 = vunpack.c.l.s4 1983009808
        %v2571 = vunpack.c.0.s8 %v2570
        %v2572 = vlaneseq
        %v2573 = vshrl.u32 %v2572, 7
        %v2574 = vsub.s32 %v2571, %v2573
        %v2575 = vrot.slane %v2515, %v2574
        %v2578 = vunpack.c.l.s4 1983009808
        %v2579 = vunpack.c.0.s8 %v2578
        %v2580 = vlaneseq
        %v2581 = vshrl.u32 %v2580, 7
        %v2582 = vsub.s32 %v2579, %v2581
        %v2583 = vrot.slane %v2521, %v2582
        %v2584 = vcombine.low %v2575, %v2583
        %v2585 = vcombine.high %v2575, %v2583
        %v2587 = vunpack.c.l.s4 1934713408
        %v2588 = vunpack.c.0.s8 %v2587
        %v2589 = vlaneseq
        %v2590 = vshrl.u32 %v2589, 7
        %v2591 = vsub.s32 %v2588, %v2590
        %v2592 = vrot.slane %v2584, %v2591
        %v2594 = vunpack.c.l.s4 1934713408
        %v2595 = vunpack.c.0.s8 %v2594
        %v2596 = vlaneseq
        %v2597 = vshrl.u32 %v2596, 7
        %v2598 = vsub.s32 %v2595, %v2597
        %v2599 = vrot.slane %v2585, %v2598
        %v2600 = vcombine.high %v2592, 0
        %v2601 = vcombine.high %v2599, 0
        %v2604 = vunpack.c.l.s4 1983009808
        %v2605 = vunpack.c.0.s8 %v2604
        %v2606 = vlaneseq
        %v2607 = vshrl.u32 %v2606, 7
        %v2608 = vsub.s32 %v2605, %v2607
        %v2609 = vrot.slane %v2524, %v2608
        %v2612 = vunpack.c.l.s4 1983009808
        %v2613 = vunpack.c.0.s8 %v2612
        %v2614 = vlaneseq
        %v2615 = vshrl.u32 %v2614, 7
        %v2616 = vsub.s32 %v2613, %v2615
        %v2617 = vrot.slane %v2530, %v2616
        %v2618 = vcombine.low %v2609, %v2617
        %v2619 = vcombine.high %v2609, %v2617
        %v2621 = vunpack.c.l.s4 1934713408
        %v2622 = vunpack.c.0.s8 %v2621
        %v2623 = vlaneseq
        %v2624 = vshrl.u32 %v2623, 7
        %v2625 = vsub.s32 %v2622, %v2624
        %v2626 = vrot.slane %v2618, %v2625
        %v2628 = vunpack.c.l.s4 1934713408
        %v2629 = vunpack.c.0.s8 %v2628
        %v2630 = vlaneseq
        %v2631 = vshrl.u32 %v2630, 7
        %v2632 = vsub.s32 %v2629, %v2631
        %v2633 = vrot.slane %v2619, %v2632
        %v2634 = vcombine.high %v2626, 0
        %v2635 = vcombine.high %v2633, 0
        %v2638 = vunpack.c.l.s4 1983009808
        %v2639 = vunpack.c.0.s8 %v2638
        %v2640 = vlaneseq
        %v2641 = vshrl.u32 %v2640, 7
        %v2642 = vsub.s32 %v2639, %v2641
        %v2643 = vrot.slane %v2527, %v2642
        %v2646 = vunpack.c.l.s4 1983009808
        %v2647 = vunpack.c.0.s8 %v2646
        %v2648 = vlaneseq
        %v2649 = vshrl.u32 %v2648, 7
        %v2650 = vsub.s32 %v2647, %v2649
        %v2651 = vrot.slane %v2533, %v2650
        %v2652 = vcombine.low %v2643, %v2651
        %v2653 = vcombine.high %v2643, %v2651
        %v2655 = vunpack.c.l.s4 1934713408
        %v2656 = vunpack.c.0.s8 %v2655
        %v2657 = vlaneseq
        %v2658 = vshrl.u32 %v2657, 7
        %v2659 = vsub.s32 %v2656, %v2658
        %v2660 = vrot.slane %v2652, %v2659
        %v2662 = vunpack.c.l.s4 1934713408
        %v2663 = vunpack.c.0.s8 %v2662
        %v2664 = vlaneseq
        %v2665 = vshrl.u32 %v2664, 7
        %v2666 = vsub.s32 %v2663, %v2665
        %v2667 = vrot.slane %v2653, %v2666
        %v2668 = vcombine.high %v2660, 0
        %v2669 = vcombine.high %v2667, 0
        %v2671 = vunpack.c.l.b16 %v2592
        %v2672 = vpack.c.b16 %v2671, %v2671
        %2673 = vrot.lane.b32.xlu0 %v2672, 16
        %v2674 = vpop.permute.xlu0 %2673
        %v2676 = vunpack.c.l.b16 %v2566
        %v2677 = vpack.c.b16 %v2676, %v2676
        %2678 = vrot.lane.b32.xlu0 %v2677, 32
        %v2679 = vpop.permute.xlu0 %2678
        %v2681 = vunpack.c.l.b16 %v2600
        %v2682 = vpack.c.b16 %v2681, %v2681
        %2683 = vrot.lane.b32.xlu0 %v2682, 48
        %v2684 = vpop.permute.xlu0 %2683
        %v2686 = vunpack.c.l.b16 %v2565
        %v2687 = vpack.c.b16 %v2686, %v2686
        %2688 = vrot.lane.b32.xlu0 %v2687, 64
        %v2689 = vpop.permute.xlu0 %2688
        %v2691 = vunpack.c.l.b16 %v2599
        %v2692 = vpack.c.b16 %v2691, %v2691
        %2693 = vrot.lane.b32.xlu0 %v2692, 80
        %v2694 = vpop.permute.xlu0 %2693
        %v2696 = vunpack.c.l.b16 %v2567
        %v2697 = vpack.c.b16 %v2696, %v2696
        %2698 = vrot.lane.b32.xlu0 %v2697, 96
        %v2699 = vpop.permute.xlu0 %2698
        %v2701 = vunpack.c.l.b16 %v2601
        %v2702 = vpack.c.b16 %v2701, %v2701
        %2703 = vrot.lane.b32.xlu0 %v2702, 112
        %v2704 = vpop.permute.xlu0 %2703
        %v2706 = vunpack.c.l.b16 %v2660
        %v2707 = vpack.c.b16 %v2706, %v2706
        %2708 = vrot.lane.b32.xlu0 %v2707, 16
        %v2709 = vpop.permute.xlu0 %2708
        %v2711 = vunpack.c.l.b16 %v2634
        %v2712 = vpack.c.b16 %v2711, %v2711
        %2713 = vrot.lane.b32.xlu0 %v2712, 32
        %v2714 = vpop.permute.xlu0 %2713
        %v2716 = vunpack.c.l.b16 %v2668
        %v2717 = vpack.c.b16 %v2716, %v2716
        %2718 = vrot.lane.b32.xlu0 %v2717, 48
        %v2719 = vpop.permute.xlu0 %2718
        %v2721 = vunpack.c.l.b16 %v2633
        %v2722 = vpack.c.b16 %v2721, %v2721
        %2723 = vrot.lane.b32.xlu0 %v2722, 64
        %v2724 = vpop.permute.xlu0 %2723
        %v2726 = vunpack.c.l.b16 %v2667
        %v2727 = vpack.c.b16 %v2726, %v2726
        %2728 = vrot.lane.b32.xlu0 %v2727, 80
        %v2729 = vpop.permute.xlu0 %2728
        %v2731 = vunpack.c.l.b16 %v2635
        %v2732 = vpack.c.b16 %v2731, %v2731
        %2733 = vrot.lane.b32.xlu0 %v2732, 96
        %v2734 = vpop.permute.xlu0 %2733
        %v2736 = vunpack.c.l.b16 %v2669
        %v2737 = vpack.c.b16 %v2736, %v2736
        %2738 = vrot.lane.b32.xlu0 %v2737, 112
        %v2739 = vpop.permute.xlu0 %2738
        %v2742 = vsel %vm655, %v2558, %v2674
        %v2744 = vsel %vm659, %v2742, %v2679
        %v2746 = vsel %vm662, %v2744, %v2684
        %v2748 = vsel %vm665, %v2746, %v2689
        %v2750 = vsel %vm668, %v2748, %v2694
        %v2752 = vsel %vm671, %v2750, %v2699
        %v2754 = vsel %vm674, %v2752, %v2704
        %v2757 = vsel %vm655, %v2626, %v2709
        %v2759 = vsel %vm659, %v2757, %v2714
        %v2761 = vsel %vm662, %v2759, %v2719
        %v2763 = vsel %vm665, %v2761, %v2724
        %v2765 = vsel %vm668, %v2763, %v2729
        %v2767 = vsel %vm671, %v2765, %v2734
        %v2769 = vsel %vm674, %v2767, %v2739
        %v2772 = vunpack.c.l.b16 %v2754
        %v2773 = vunpack.c.l.b16 %v2769
        %v2774 = vpack.c.b16 %v2773, %v2772
        %v2775 = vrot.slane %v2774, 6
        %2777 = vst [vmem:[#allocation3 + $0x18] sm:$0xcc] %v2775
        %2778 = vrot.lane.b32.xlu0 %v2202, 126
        %v2779 = vpop.permute.xlu0 %2778
        %2780 = vrot.lane.b32.xlu0 %v2205, 126
        %v2781 = vpop.permute.xlu0 %2780
        %2782 = vrot.lane.b32.xlu0 %v2209, 126
        %v2783 = vpop.permute.xlu0 %2782
        %2784 = vrot.lane.b32.xlu0 %v2212, 126
        %v2785 = vpop.permute.xlu0 %2784
        %2786 = vrot.lane.b32.xlu0 %v2216, 126
        %v2787 = vpop.permute.xlu0 %2786
        %2788 = vrot.lane.b32.xlu0 %v2219, 126
        %v2789 = vpop.permute.xlu0 %2788
        %2790 = vrot.lane.b32.xlu0 %v2223, 126
        %v2791 = vpop.permute.xlu0 %2790
        %2792 = vrot.lane.b32.xlu0 %v2226, 126
        %v2793 = vpop.permute.xlu0 %2792
        %v2796 = vpack.i.b16 %v2783, %v2779
        %v2797 = vshrl.u32 %v2779, 16
        %v2798 = vshrl.u32 %v2783, 16
        %v2799 = vpack.i.b16 %v2798, %v2797
        %v2802 = vpack.i.b16 %v2791, %v2787
        %v2803 = vshrl.u32 %v2787, 16
        %v2804 = vshrl.u32 %v2791, 16
        %v2805 = vpack.i.b16 %v2804, %v2803
        %v2808 = vpack.i.b16 %v2785, %v2781
        %v2809 = vshrl.u32 %v2781, 16
        %v2810 = vshrl.u32 %v2785, 16
        %v2811 = vpack.i.b16 %v2810, %v2809
        %v2814 = vpack.i.b16 %v2793, %v2789
        %v2815 = vshrl.u32 %v2789, 16
        %v2816 = vshrl.u32 %v2793, 16
        %v2817 = vpack.i.b16 %v2816, %v2815
        %v2820 = vunpack.c.l.s4 1983009808
        %v2821 = vunpack.c.0.s8 %v2820
        %v2822 = vlaneseq
        %v2823 = vshrl.u32 %v2822, 7
        %v2824 = vsub.s32 %v2821, %v2823
        %v2825 = vrot.slane %v2796, %v2824
        %v2828 = vunpack.c.l.s4 1983009808
        %v2829 = vunpack.c.0.s8 %v2828
        %v2830 = vlaneseq
        %v2831 = vshrl.u32 %v2830, 7
        %v2832 = vsub.s32 %v2829, %v2831
        %v2833 = vrot.slane %v2802, %v2832
        %v2834 = vcombine.low %v2825, %v2833
        %v2835 = vcombine.high %v2825, %v2833
        %v2837 = vunpack.c.l.s4 1934713408
        %v2838 = vunpack.c.0.s8 %v2837
        %v2839 = vlaneseq
        %v2840 = vshrl.u32 %v2839, 7
        %v2841 = vsub.s32 %v2838, %v2840
        %v2842 = vrot.slane %v2834, %v2841
        %v2844 = vunpack.c.l.s4 1934713408
        %v2845 = vunpack.c.0.s8 %v2844
        %v2846 = vlaneseq
        %v2847 = vshrl.u32 %v2846, 7
        %v2848 = vsub.s32 %v2845, %v2847
        %v2849 = vrot.slane %v2835, %v2848
        %v2850 = vcombine.high %v2842, 0
        %v2851 = vcombine.high %v2849, 0
        %v2854 = vunpack.c.l.s4 1983009808
        %v2855 = vunpack.c.0.s8 %v2854
        %v2856 = vlaneseq
        %v2857 = vshrl.u32 %v2856, 7
        %v2858 = vsub.s32 %v2855, %v2857
        %v2859 = vrot.slane %v2799, %v2858
        %v2862 = vunpack.c.l.s4 1983009808
        %v2863 = vunpack.c.0.s8 %v2862
        %v2864 = vlaneseq
        %v2865 = vshrl.u32 %v2864, 7
        %v2866 = vsub.s32 %v2863, %v2865
        %v2867 = vrot.slane %v2805, %v2866
        %v2868 = vcombine.low %v2859, %v2867
        %v2869 = vcombine.high %v2859, %v2867
        %v2871 = vunpack.c.l.s4 1934713408
        %v2872 = vunpack.c.0.s8 %v2871
        %v2873 = vlaneseq
        %v2874 = vshrl.u32 %v2873, 7
        %v2875 = vsub.s32 %v2872, %v2874
        %v2876 = vrot.slane %v2868, %v2875
        %v2878 = vunpack.c.l.s4 1934713408
        %v2879 = vunpack.c.0.s8 %v2878
        %v2880 = vlaneseq
        %v2881 = vshrl.u32 %v2880, 7
        %v2882 = vsub.s32 %v2879, %v2881
        %v2883 = vrot.slane %v2869, %v2882
        %v2884 = vcombine.high %v2876, 0
        %v2885 = vcombine.high %v2883, 0
        %v2888 = vunpack.c.l.s4 1983009808
        %v2889 = vunpack.c.0.s8 %v2888
        %v2890 = vlaneseq
        %v2891 = vshrl.u32 %v2890, 7
        %v2892 = vsub.s32 %v2889, %v2891
        %v2893 = vrot.slane %v2808, %v2892
        %v2896 = vunpack.c.l.s4 1983009808
        %v2897 = vunpack.c.0.s8 %v2896
        %v2898 = vlaneseq
        %v2899 = vshrl.u32 %v2898, 7
        %v2900 = vsub.s32 %v2897, %v2899
        %v2901 = vrot.slane %v2814, %v2900
        %v2902 = vcombine.low %v2893, %v2901
        %v2903 = vcombine.high %v2893, %v2901
        %v2905 = vunpack.c.l.s4 1934713408
        %v2906 = vunpack.c.0.s8 %v2905
        %v2907 = vlaneseq
        %v2908 = vshrl.u32 %v2907, 7
        %v2909 = vsub.s32 %v2906, %v2908
        %v2910 = vrot.slane %v2902, %v2909
        %v2912 = vunpack.c.l.s4 1934713408
        %v2913 = vunpack.c.0.s8 %v2912
        %v2914 = vlaneseq
        %v2915 = vshrl.u32 %v2914, 7
        %v2916 = vsub.s32 %v2913, %v2915
        %v2917 = vrot.slane %v2903, %v2916
        %v2918 = vcombine.high %v2910, 0
        %v2919 = vcombine.high %v2917, 0
        %v2922 = vunpack.c.l.s4 1983009808
        %v2923 = vunpack.c.0.s8 %v2922
        %v2924 = vlaneseq
        %v2925 = vshrl.u32 %v2924, 7
        %v2926 = vsub.s32 %v2923, %v2925
        %v2927 = vrot.slane %v2811, %v2926
        %v2930 = vunpack.c.l.s4 1983009808
        %v2931 = vunpack.c.0.s8 %v2930
        %v2932 = vlaneseq
        %v2933 = vshrl.u32 %v2932, 7
        %v2934 = vsub.s32 %v2931, %v2933
        %v2935 = vrot.slane %v2817, %v2934
        %v2936 = vcombine.low %v2927, %v2935
        %v2937 = vcombine.high %v2927, %v2935
        %v2939 = vunpack.c.l.s4 1934713408
        %v2940 = vunpack.c.0.s8 %v2939
        %v2941 = vlaneseq
        %v2942 = vshrl.u32 %v2941, 7
        %v2943 = vsub.s32 %v2940, %v2942
        %v2944 = vrot.slane %v2936, %v2943
        %v2946 = vunpack.c.l.s4 1934713408
        %v2947 = vunpack.c.0.s8 %v2946
        %v2948 = vlaneseq
        %v2949 = vshrl.u32 %v2948, 7
        %v2950 = vsub.s32 %v2947, %v2949
        %v2951 = vrot.slane %v2937, %v2950
        %v2952 = vcombine.high %v2944, 0
        %v2953 = vcombine.high %v2951, 0
        %v2955 = vunpack.c.l.b16 %v2876
        %v2956 = vpack.c.b16 %v2955, %v2955
        %2957 = vrot.lane.b32.xlu0 %v2956, 16
        %v2958 = vpop.permute.xlu0 %2957
        %v2960 = vunpack.c.l.b16 %v2850
        %v2961 = vpack.c.b16 %v2960, %v2960
        %2962 = vrot.lane.b32.xlu0 %v2961, 32
        %v2963 = vpop.permute.xlu0 %2962
        %v2965 = vunpack.c.l.b16 %v2884
        %v2966 = vpack.c.b16 %v2965, %v2965
        %2967 = vrot.lane.b32.xlu0 %v2966, 48
        %v2968 = vpop.permute.xlu0 %2967
        %v2970 = vunpack.c.l.b16 %v2849
        %v2971 = vpack.c.b16 %v2970, %v2970
        %2972 = vrot.lane.b32.xlu0 %v2971, 64
        %v2973 = vpop.permute.xlu0 %2972
        %v2975 = vunpack.c.l.b16 %v2883
        %v2976 = vpack.c.b16 %v2975, %v2975
        %2977 = vrot.lane.b32.xlu0 %v2976, 80
        %v2978 = vpop.permute.xlu0 %2977
        %v2980 = vunpack.c.l.b16 %v2851
        %v2981 = vpack.c.b16 %v2980, %v2980
        %2982 = vrot.lane.b32.xlu0 %v2981, 96
        %v2983 = vpop.permute.xlu0 %2982
        %v2985 = vunpack.c.l.b16 %v2885
        %v2986 = vpack.c.b16 %v2985, %v2985
        %2987 = vrot.lane.b32.xlu0 %v2986, 112
        %v2988 = vpop.permute.xlu0 %2987
        %v2990 = vunpack.c.l.b16 %v2944
        %v2991 = vpack.c.b16 %v2990, %v2990
        %2992 = vrot.lane.b32.xlu0 %v2991, 16
        %v2993 = vpop.permute.xlu0 %2992
        %v2995 = vunpack.c.l.b16 %v2918
        %v2996 = vpack.c.b16 %v2995, %v2995
        %2997 = vrot.lane.b32.xlu0 %v2996, 32
        %v2998 = vpop.permute.xlu0 %2997
        %v3000 = vunpack.c.l.b16 %v2952
        %v3001 = vpack.c.b16 %v3000, %v3000
        %3002 = vrot.lane.b32.xlu0 %v3001, 48
        %v3003 = vpop.permute.xlu0 %3002
        %v3005 = vunpack.c.l.b16 %v2917
        %v3006 = vpack.c.b16 %v3005, %v3005
        %3007 = vrot.lane.b32.xlu0 %v3006, 64
        %v3008 = vpop.permute.xlu0 %3007
        %v3010 = vunpack.c.l.b16 %v2951
        %v3011 = vpack.c.b16 %v3010, %v3010
        %3012 = vrot.lane.b32.xlu0 %v3011, 80
        %v3013 = vpop.permute.xlu0 %3012
        %v3015 = vunpack.c.l.b16 %v2919
        %v3016 = vpack.c.b16 %v3015, %v3015
        %3017 = vrot.lane.b32.xlu0 %v3016, 96
        %v3018 = vpop.permute.xlu0 %3017
        %v3020 = vunpack.c.l.b16 %v2953
        %v3021 = vpack.c.b16 %v3020, %v3020
        %3022 = vrot.lane.b32.xlu0 %v3021, 112
        %v3023 = vpop.permute.xlu0 %3022
        %v3026 = vsel %vm655, %v2842, %v2958
        %v3028 = vsel %vm659, %v3026, %v2963
        %v3030 = vsel %vm662, %v3028, %v2968
        %v3032 = vsel %vm665, %v3030, %v2973
        %v3034 = vsel %vm668, %v3032, %v2978
        %v3036 = vsel %vm671, %v3034, %v2983
        %v3038 = vsel %vm674, %v3036, %v2988
        %v3041 = vsel %vm655, %v2910, %v2993
        %v3043 = vsel %vm659, %v3041, %v2998
        %v3045 = vsel %vm662, %v3043, %v3003
        %v3047 = vsel %vm665, %v3045, %v3008
        %v3049 = vsel %vm668, %v3047, %v3013
        %v3051 = vsel %vm671, %v3049, %v3018
        %v3053 = vsel %vm674, %v3051, %v3023
        %v3056 = vunpack.c.l.b16 %v3038
        %v3057 = vunpack.c.l.b16 %v3053
        %v3058 = vpack.c.b16 %v3057, %v3056
        %3060 = vst [vmem:[#allocation3 + $0x20] sm:$0x33] %v3058
        %v3061 = vld [vmem:[#allocation3] sm:$0xff]
        %v3062 = vld [vmem:[#allocation3 + $0x8] sm:$0xff]
        %v3063 = vld [vmem:[#allocation3 + $0x10] sm:$0xff]
        %v3064 = vld [vmem:[#allocation3 + $0x18] sm:$0xff]
        %v3065 = vld [vmem:[#allocation3 + $0x20] sm:$0x33]
        %v3071 = vunpack.c.l.b16 %v3061
        %v3072 = vunpack.c.h.b16 %v3061
        %v3073 = vunpack.c.l.b16 %v3062
        %v3074 = vunpack.c.h.b16 %v3062
        %v3075 = vunpack.c.l.b16 %v3063
        %v3076 = vunpack.c.h.b16 %v3063
        %v3077 = vunpack.c.l.b16 %v3064
        %v3078 = vunpack.c.h.b16 %v3064
        %v3079 = vunpack.c.l.b16 %v3065
        %v3080 = vunpack.c.h.b16 %v3065
        %v3081 = vpack.c.b16 %v3073, %v3071
        %v3082 = vpack.c.b16 %v3074, %v3072
        %v3083 = vpack.c.b16 %v3077, %v3075
        %v3084 = vpack.c.b16 %v3078, %v3076
        %v3085 = vpack.c.b16 %v3079, %v3079
        %v3086 = vpack.c.b16 %v3080, %v3080
        %vm3091 = vcmask 293888
        %v3093 = vsel %vm3091, %v233, 0
        %vm3095 = vcmask 1041408
        %v3097 = vsel %vm3095, %v3085, 0
        %v3100 = vsel %vm3095, %v3086, 0
        %3102 = vmatprep.subr.bf16.mxu0 %v3082
        %3103 = vmatpush1.bf16.msra.mxu0 %v3081
        %3104 = vmatprep.subr.bf16.mxu0 %v3084
        %3105 = vmatpush1.bf16.msra.mxu0 %v3083
        %3106 = vmatprep.subr.bf16.mxu0 %v3100
        %3107 = vmatpush1.bf16.msra.mxu0 %v3097
        %3108 = vmatprep.subr.bf16.mxu0 0
        %3109 = vmatpush1.bf16.msra.mxu0 0
        %3110 = vmatprep.subr.bf16.mxu0 0
        %3111 = vmatpush1.bf16.msra.mxu0 0
        %3112 = vmatprep.subr.bf16.mxu0 0
        %3113 = vmatpush1.bf16.msra.mxu0 0
        %3114 = vmatprep.subr.bf16.mxu0 0
        %3115 = vmatpush1.bf16.msra.mxu0 0
        %3116 = vmatprep.subr.bf16.mxu0 0
        %3117 = vmatpush1.bf16.msra.mxu0 0
        %3118 = vmatprep.subr.bf16.mxu0 0
        %3119 = vmatpush1.bf16.msra.mxu0 0
        %3120 = vmatprep.subr.bf16.mxu0 0
        %3121 = vmatpush1.bf16.msra.mxu0 0
        %3122 = vmatprep.subr.bf16.mxu0 0
        %3123 = vmatpush1.bf16.msra.mxu0 0
        %3124 = vmatprep.subr.bf16.mxu0 0
        %3125 = vmatpush1.bf16.msra.mxu0 0
        %3126 = vmatprep.subr.bf16.mxu0 0
        %3127 = vmatpush1.bf16.msra.mxu0 0
        %3128 = vmatprep.subr.bf16.mxu0 0
        %3129 = vmatpush1.bf16.msra.mxu0 0
        %3130 = vmatprep.subr.bf16.mxu0 0
        %3131 = vmatpush1.bf16.msra.mxu0 0
        %3132 = vmatprep.subr.bf16.mxu0 0
        %3133 = vmatpush1.bf16.msra.mxu0 0
        %3134 = vmatprep.mubr.bf16.mxu0 0
        %3135 = vmatmul.mubr.bf16.gmra.mrb[0].mxu0 %v3093
        %v3136 = vpop.f32.mrb[0].mxu0
        %v3137 = vadd.f32 0.0, %v3136
        %v3138 = vpop.f32.mrb[0].mxu0
        %v3139 = vadd.f32 0.0, %v3138
        %v3140 = vpop.f32.mrb[0].mxu0
        %v3141 = vpop.f32.mrb[0].mxu0
        %3142 = vdwg.mxu0
        %v3143 = vadd.f32 %v3137, %v3139
        %3144 = vadd.xlane.f32.xlu0 %v3143
        %v3145 = vpop.xlane.xlu0 %3144
        %v3146 = vmul.f32 %v3145, 0.00390625
        %v3147 = vsub.f32 %v3137, %v3146
        %v3148 = vsub.f32 %v3139, %v3146
        %v3149 = vmul.f32 %v3147, %v3147
        %v3150 = vmul.f32 %v3148, %v3148
        %v3151 = vadd.f32 %v3149, %v3150
        %3152 = vadd.xlane.f32.xlu0 %v3151
        %v3153 = vpop.xlane.xlu0 %3152
        %vm3154 = vcmask 7168
        %v3155 = vsel %vm3154, %v3146, %v3153
        %3156 = vxpose.xlu0.b32.start [1/16] %v3155, 128
        %3157 = vxpose.xlu0.b32.cont [2/16] 0.0, 128
        %3158 = vxpose.xlu0.b32.cont [3/16] 0.0, 128
        %3159 = vxpose.xlu0.b32.cont [4/16] 0.0, 128
        %3160 = vxpose.xlu0.b32.cont [5/16] 0.0, 128
        %3161 = vxpose.xlu0.b32.cont [6/16] 0.0, 128
        %3162 = vxpose.xlu0.b32.cont [7/16] 0.0, 128
        %3163 = vxpose.xlu0.b32.cont [8/16] 0.0, 128
        %3164 = vxpose.xlu0.b32.cont [9/16] 0.0, 128
        %3165 = vxpose.xlu0.b32.cont [10/16] 0.0, 128
        %3166 = vxpose.xlu0.b32.cont [11/16] 0.0, 128
        %3167 = vxpose.xlu0.b32.cont [12/16] 0.0, 128
        %3168 = vxpose.xlu0.b32.cont [13/16] 0.0, 128
        %3169 = vxpose.xlu0.b32.cont [14/16] 0.0, 128
        %3170 = vxpose.xlu0.b32.cont [15/16] 0.0, 128
        %3171 = vxpose.xlu0.b32.end [16/16] 0.0, 128
        %v3172 = vpop.trf.xlu0
        %v3173 = vpop.trf.xlu0
        %v3174 = vpop.trf.xlu0
        %v3175 = vpop.trf.xlu0
        %v3176 = vpop.trf.xlu0
        %v3177 = vpop.trf.xlu0
        %v3178 = vpop.trf.xlu0
        %v3179 = vpop.trf.xlu0
        %v3180 = vpop.trf.xlu0
        %v3181 = vpop.trf.xlu0
        %v3182 = vpop.trf.xlu0
        %v3183 = vpop.trf.xlu0
        %v3184 = vpop.trf.xlu0
        %v3185 = vpop.trf.xlu0
        %v3186 = vpop.trf.xlu0
        %v3187 = vpop.trf.xlu0
        %vm3188 = vcmask 58368
        %3189 = vst.msk [vmem:[%s174] sm:$0x3] %vm3188, %v3172
        %s3190 = sand.u32 %s75, 1
        %s3191 = scalar_lea.sflag [#allocation6], %s3190
        %s3192 = sand.u32 %s75, 1
        %s3193 = smul.addr %s3192, 2
        %s3194 = scalar_lea.vmem [#allocation9], %s3193
        // Predicated region
        $region37: #{tpu_custom_call.1} parent=27 // pred_check
          %p3195 = pneg %p85
        $region38: #{tpu_custom_call.1} parent=27 // pred_check_branch
          %3197 = sbr.rel (%p3195) target = $region40
        $region39: #{tpu_custom_call.1} parent=27 // pred_region
          %s3199 = ssub.s32 32, 32
          %3200 = vsyncadd %s3191, %s3199
          %s3201 = smul.addr %s20, 32
          %s3202 = scalar_lea.hbm %s2, %s3201
          %s3204 = sshll.u32 %s3194, 4
          %s3205 = int_to_ptr.vmem [resolvable:$true] %s3204
          %3207 = dma.vmem_to_hbm [thread:$0]  %s3205, 32, %s3202, %s3191
        $region40: #{tpu_custom_call.1} parent=27 // pred_fallthru
          _
      $region28: #{tpu_custom_call.1} parent=5 // pred_fallthru
        _
      %p3208 = scmp.le.s32.totalorder 2, %s15
      // Predicated region
      $region41: #{tpu_custom_call.1} parent=5 // pred_check
        %p3209 = pneg %p3208
      $region42: #{tpu_custom_call.1} parent=5 // pred_check_branch
        %3211 = sbr.rel (%p3209) target = $region44
      $region43: #{tpu_custom_call.1} parent=5 // pred_region
        %s3212 = ssub.s32 %s15, 2
        // Predicated region
        $region45: #{tpu_custom_call.1} parent=43 // pred_check
          %p3213 = pneg %p91
        $region46: #{tpu_custom_call.1} parent=43 // pred_check_branch
          %3215 = sbr.rel (%p3213) target = $region48
        $region47: #{tpu_custom_call.1} parent=43 // pred_region
          %s3216 = sand.u32 %s76, 1
          %s3217 = scalar_lea.sflag [#allocation6], %s3216
          %s3218 = sand.u32 %s76, 1
          %s3219 = smul.addr %s3218, 2
          %s3220 = scalar_lea.vmem [#allocation9], %s3219
          %3221 = dma.done %s3217, 32
        $region48: #{tpu_custom_call.1} parent=43 // pred_fallthru
          _
      $region44: #{tpu_custom_call.1} parent=5 // pred_fallthru
        _
    $region6: #{tpu_custom_call.1} parent=1 // loop_footer
      %s19 = sadd.s32 1, %s15
    $region7: #{tpu_custom_call.1} parent=1 // loop_footer_branch
      %14 = sbr.rel target = $region3
    $region8: #{tpu_custom_call.1} parent=1 // loop_exit
      _
    %3222 = vsyncpa [#allocation5], 1
    %s3223 = scalar_lea.sflag [#allocation5], 1
    %3224 = vsyncpa %s3223, 1
    %3225 = vsyncpa [#allocation8], 1
    %3226 = vsyncpa [#allocation6], 1
    %s3227 = scalar_lea.sflag [#allocation6], 1
    %3228 = vsyncpa %s3227, 1

</llo_original>
